<compile_context>
chip_gen: v5e
topology: v5e:2x2
jax: 0.10.0
libtpu: 0.0.40
codegen_flags: <defaults>
</compile_context>

<pallas_src>
import functools

import jax
import jax.numpy as jnp
from jax import lax
from jax.experimental import pallas as pl
from jax.experimental.pallas import tpu as pltpu


# ---------------------------------------------------------------------------
# Fused kernel: [GroupNorm -> SiLU ->] Conv3x3 [-> + residual / + 1x1(x)]
# ---------------------------------------------------------------------------
def _fused_block_kernel(*refs, H, W, cin, inv_n, eps, apply_gn_act,
                        residual_mode):
    it = iter(refs)
    x_ref = next(it)                                   # (1, H, W, cin)
    if apply_gn_act:
        gamma_ref = next(it)                           # (1, cin)
        beta_ref = next(it)                            # (1, cin)
        m_ref = next(it)                               # (cin, G) one-hot ch->grp
        mt_ref = next(it)                              # (G, cin)
    w_ref = next(it)                                   # (9*cin, tile_n)
    b_ref = next(it)                                   # (1, tile_n)
    if residual_mode == "identity":
        r_ref = next(it)                               # (1, H, W, tile_n)
    elif residual_mode == "nin":
        r_ref = next(it)                               # (1, H, W, cr)
        wsc_ref = next(it)                             # (cr, tile_n)
        bsc_ref = next(it)                             # (1, tile_n)
    o_ref = next(it)                                   # (1, H, W, tile_n)
    xp_ref = next(it)                                  # VMEM (H+2, W+2, cin)
    col_ref = next(it)                                 # VMEM (H*W, 9*cin)

    j = pl.program_id(1)                               # Cout-tile index

    # Stage GN+SiLU+im2col once per image; reused across all Cout tiles.
    @pl.when(j == 0)
    def _stage():
        x = x_ref[...].reshape(H * W, cin).astype(jnp.float32)
        if apply_gn_act:
            # Per-channel sums -> group stats via tiny one-hot matmuls
            # (once per image; negligible MXU work), keep math in f32.
            s1 = jnp.sum(x, axis=0, keepdims=True)                    # (1, cin)
            s2 = jnp.sum(x * x, axis=0, keepdims=True)                # (1, cin)
            m = m_ref[...]
            mt = mt_ref[...]
            mean_g = jnp.dot(s1, m, preferred_element_type=jnp.float32) * inv_n
            ex2_g = jnp.dot(s2, m, preferred_element_type=jnp.float32) * inv_n
            inv_g = lax.rsqrt(ex2_g - mean_g * mean_g + eps)
            mean_c = jnp.dot(mean_g, mt, preferred_element_type=jnp.float32)
            inv_c = jnp.dot(inv_g, mt, preferred_element_type=jnp.float32)
            y = (x - mean_c) * (inv_c * gamma_ref[...]) + beta_ref[...]
            y = y * jax.nn.sigmoid(y)                                 # SiLU
        else:
            y = x
        # SAME padding inside the kernel: zero halo scratch, write interior.
        xp_ref[...] = jnp.zeros(xp_ref.shape, jnp.float32)
        xp_ref[pl.ds(1, H), pl.ds(1, W), :] = y.reshape(H, W, cin)
        xp = xp_ref[...]
        # im2col: (H*W, 9*cin), column order (dy, dx, cin) matching the
        # (3,3,Cin,Cout) -> (9*Cin, Cout) weight reshape.
        cols = []
        for dy in range(3):
            for dx in range(3):
                cols.append(xp[dy:dy + H, dx:dx + W, :].reshape(H * W, cin))
        col_ref[...] = jnp.concatenate(cols, axis=1)

    # One MXU matmul per Cout tile with K = 9*Cin, then fused epilogue.
    acc = jnp.dot(col_ref[...], w_ref[...], preferred_element_type=jnp.float32)
    acc = acc + b_ref[...].astype(jnp.float32)
    if residual_mode == "identity":
        acc = acc + r_ref[...].reshape(H * W, -1).astype(jnp.float32)
    elif residual_mode == "nin":
        r = r_ref[...].reshape(H * W, -1).astype(jnp.float32)
        acc = acc + jnp.dot(r, wsc_ref[...].astype(jnp.float32),
                            preferred_element_type=jnp.float32)
        acc = acc + bsc_ref[...].astype(jnp.float32)
    o_ref[...] = acc.reshape(o_ref.shape).astype(o_ref.dtype)


def _pick_cout_tile(cout, target):
    if cout <= target:
        return cout
    for cand in (target, 256, 128):
        if cand <= target and cout % cand == 0:
            return cand
    return cout  # fall back to untiled Cout


# ---------------------------------------------------------------------------
# Wrapper: one pallas_call per Block (or per plain shortcut conv)
# ---------------------------------------------------------------------------
def fused_block(x, gamma, beta, w_hwio, b, *, num_groups=32, eps=1e-6,
                apply_gn_act=True, residual=None, residual_mode=None,
                wsc=None, bsc=None, tile_n_target=256):
    # tile_n_target: 256 matches v6e/v7x MXU width; use 128 on v5e.
    N, H, W, Cin = x.shape
    Cout = w_hwio.shape[-1]
    tile_n = _pick_cout_tile(Cout, tile_n_target)
    nj = Cout // tile_n

    # Weights/bias in f32; cast to bf16 here on v6e/v7x for 2x MXU rate if the
    # activation dtype is bf16 (accumulation stays f32 via preferred_element_type).
    w2d = jnp.asarray(w_hwio, jnp.float32).reshape(9 * Cin, Cout)
    b2d = jnp.asarray(b, jnp.float32).reshape(1, Cout)

    inputs = [x]
    in_specs = [pl.BlockSpec((1, H, W, Cin), lambda n, j: (n, 0, 0, 0))]

    if apply_gn_act:
        G = num_groups
        cg = Cin // G
        one_hot = (jnp.arange(Cin)[:, None] // cg
                   == jnp.arange(G)[None, :]).astype(jnp.float32)
        inputs += [jnp.asarray(gamma, jnp.float32).reshape(1, Cin),
                   jnp.asarray(beta, jnp.float32).reshape(1, Cin),
                   one_hot, one_hot.T]
        in_specs += [pl.BlockSpec((1, Cin), lambda n, j: (0, 0)),
                     pl.BlockSpec((1, Cin), lambda n, j: (0, 0)),
                     pl.BlockSpec((Cin, G), lambda n, j: (0, 0)),
                     pl.BlockSpec((G, Cin), lambda n, j: (0, 0))]
        inv_n = 1.0 / (H * W * cg)
    else:
        inv_n = 1.0

    inputs += [w2d, b2d]
    in_specs += [pl.BlockSpec((9 * Cin, tile_n), lambda n, j: (0, j)),
                 pl.BlockSpec((1, tile_n), lambda n, j: (0, j))]

    if residual_mode == "identity":
        inputs += [residual]
        in_specs += [pl.BlockSpec((1, H, W, tile_n), lambda n, j: (n, 0, 0, j))]
    elif residual_mode == "nin":
        Cr = residual.shape[-1]
        inputs += [residual,
                   jnp.asarray(wsc, jnp.float32),
                   jnp.asarray(bsc, jnp.float32).reshape(1, Cout)]
        in_specs += [pl.BlockSpec((1, H, W, Cr), lambda n, j: (n, 0, 0, 0)),
                     pl.BlockSpec((Cr, tile_n), lambda n, j: (0, j)),
                     pl.BlockSpec((1, tile_n), lambda n, j: (0, j))]

    kernel = functools.partial(
        _fused_block_kernel, H=H, W=W, cin=Cin, inv_n=inv_n, eps=eps,
        apply_gn_act=apply_gn_act, residual_mode=residual_mode)

    return pl.pallas_call(
        kernel,
        out_shape=jax.ShapeDtypeStruct((N, H, W, Cout), x.dtype),
        grid=(N, nj),
        in_specs=in_specs,
        out_specs=pl.BlockSpec((1, H, W, tile_n), lambda n, j: (n, 0, 0, j)),
        scratch_shapes=[pltpu.VMEM((H + 2, W + 2, Cin), jnp.float32),
                        pltpu.VMEM((H * W, 9 * Cin), jnp.float32)],
        compiler_params=pltpu.CompilerParams(
            dimension_semantics=("parallel", "arbitrary"),
            vmem_limit_bytes=48 * 1024 * 1024),
    )(*inputs)


# ---------------------------------------------------------------------------
# ResnetBlock forward (Pallas path) — parameters kept in PyTorch (OIHW) layout
# ---------------------------------------------------------------------------
def resnet_block_forward(x_nchw, p, *, in_ch, out_ch, conv_shortcut=False):
    x = jnp.transpose(x_nchw, (0, 2, 3, 1))                # NCHW -> NHWC
    w1 = jnp.transpose(p["w1"], (2, 3, 1, 0))               # OIHW -> HWIO
    w2 = jnp.transpose(p["w2"], (2, 3, 1, 0))

    # Block 1: GN + SiLU + conv3x3 fused.
    h = fused_block(x, p["gamma1"], p["beta1"], w1, p["b1"])

    # Block 2: GN + SiLU + conv3x3 with the shortcut fused into the epilogue.
    if in_ch != out_ch:
        if conv_shortcut:
            wsc = jnp.transpose(p["wsc"], (2, 3, 1, 0))
            x_sc = fused_block(x, None, None, wsc, p["bsc"],
                               apply_gn_act=False)          # plain conv3x3
            out = fused_block(h, p["gamma2"], p["beta2"], w2, p["b2"],
                              residual=x_sc, residual_mode="identity")
        else:
            wsc = jnp.transpose(p["wsc"][:, :, 0, 0], (1, 0))    # (Cin, Cout)
            out = fused_block(h, p["gamma2"], p["beta2"], w2, p["b2"],
                              residual=x, residual_mode="nin",
                              wsc=wsc, bsc=p["bsc"])
    else:
        out = fused_block(h, p["gamma2"], p["beta2"], w2, p["b2"],
                          residual=x, residual_mode="identity")
    return jnp.transpose(out, (0, 3, 1, 2))                  # NHWC -> NCHW


# ---------------------------------------------------------------------------
# Deterministic parameter init (shapes match the PyTorch module)
# ---------------------------------------------------------------------------
def init_params(key, in_ch, out_ch, conv_shortcut=False):
    ks = jax.random.split(key, 8)
    p = {
        "gamma1": 1.0 + 0.1 * jax.random.normal(ks[0], (in_ch,), jnp.float32),
        "beta1": 0.1 * jax.random.normal(ks[1], (in_ch,), jnp.float32),
        "w1": 0.05 * jax.random.normal(ks[2], (out_ch, in_ch, 3, 3), jnp.float32),
        "b1": 0.1 * jax.random.normal(ks[3], (out_ch,), jnp.float32),
        "gamma2": 1.0 + 0.1 * jax.random.normal(ks[4], (out_ch,), jnp.float32),
        "beta2": 0.1 * jax.random.normal(ks[5], (out_ch,), jnp.float32),
        "w2": 0.05 * jax.random.normal(ks[6], (out_ch, out_ch, 3, 3), jnp.float32),
        "b2": 0.1 * jax.random.normal(ks[7], (out_ch,), jnp.float32),
    }
    if in_ch != out_ch:
        k1, k2 = jax.random.split(jax.random.fold_in(key, 99))
        kh = 3 if conv_shortcut else 1
        p["wsc"] = 0.05 * jax.random.normal(k1, (out_ch, in_ch, kh, kh), jnp.float32)
        p["bsc"] = 0.1 * jax.random.normal(k2, (out_ch,), jnp.float32)
    return p


# ---------------------------------------------------------------------------
# Pure-JAX reference (mirrors the PyTorch forward exactly, NCHW)
# ---------------------------------------------------------------------------
def reference_forward(x, p, *, in_ch, out_ch, conv_shortcut=False,
                      num_groups=32, eps=1e-6):
    def gn(x, gamma, beta):
        N, C, H, W = x.shape
        xg = x.reshape(N, num_groups, -1)
        mean = xg.mean(axis=-1, keepdims=True)
        var = xg.var(axis=-1, keepdims=True)
        xn = ((xg - mean) / jnp.sqrt(var + eps)).reshape(N, C, H, W)
        return xn * gamma[None, :, None, None] + beta[None, :, None, None]

    def silu(v):
        return v * jax.nn.sigmoid(v)

    def conv(v, w, b, pad):
        y = lax.conv_general_dilated(
            v, w, window_strides=(1, 1), padding=((pad, pad), (pad, pad)),
            dimension_numbers=("NCHW", "OIHW", "NCHW"),
            precision=lax.Precision.HIGHEST)
        return y + b[None, :, None, None]

    h = conv(silu(gn(x, p["gamma1"], p["beta1"])), p["w1"], p["b1"], 1)
    h = conv(silu(gn(h, p["gamma2"], p["beta2"])), p["w2"], p["b2"], 1)
    if in_ch != out_ch:
        pad = 1 if conv_shortcut else 0
        x = conv(x, p["wsc"], p["bsc"], pad)
    return x + h


if __name__ == "__main__":
    # GroupNorm(num_groups=32) requires channels % 32 == 0.
    key = jax.random.PRNGKey(0)
    configs = [
        dict(N=2, in_ch=32, out_ch=64, H=8, W=8, conv_shortcut=False),  # nin shortcut
        dict(N=2, in_ch=32, out_ch=32, H=8, W=8, conv_shortcut=False),  # identity shortcut
    ]
    for i, cfg in enumerate(configs):
        kx, kp = jax.random.split(jax.random.fold_in(key, i))
        x = jax.random.normal(kx, (cfg["N"], cfg["in_ch"], cfg["H"], cfg["W"]),
                              jnp.float32)
        params = init_params(kp, cfg["in_ch"], cfg["out_ch"],
                             conv_shortcut=cfg["conv_shortcut"])
        out = resnet_block_forward(x, params, in_ch=cfg["in_ch"],
                                   out_ch=cfg["out_ch"],
                                   conv_shortcut=cfg["conv_shortcut"])
        out = jax.block_until_ready(out)
        ref = reference_forward(x, params, in_ch=cfg["in_ch"],
                                out_ch=cfg["out_ch"],
                                conv_shortcut=cfg["conv_shortcut"])
        assert out.shape == ref.shape, (out.shape, ref.shape)
        max_err = float(jnp.max(jnp.abs(out - ref)))
        assert jnp.allclose(out, ref, atol=2e-3, rtol=2e-3), (i, max_err)
    print("KERNEL_OK")
</pallas_src>

<mosaic_0001>
module attributes {stable_mosaic.version = 11 : i64} {
  func.func @_fused_block_kernel(%arg0: i32, %arg1: i32, %arg2: memref<1x8x8x32xf32, #tpu.memory_space<vmem>>, %arg3: memref<1x32xf32, #tpu.memory_space<vmem>>, %arg4: memref<1x32xf32, #tpu.memory_space<vmem>>, %arg5: memref<32x32xf32, #tpu.memory_space<vmem>>, %arg6: memref<32x32xf32, #tpu.memory_space<vmem>>, %arg7: memref<288x64xf32, #tpu.memory_space<vmem>>, %arg8: memref<1x64xf32, #tpu.memory_space<vmem>>, %arg9: memref<1x8x8x64xf32, #tpu.memory_space<vmem>>, %arg10: memref<10x10x32xf32, #tpu.memory_space<vmem>>, %arg11: memref<64x288xf32, #tpu.memory_space<vmem>>) attributes {dimension_semantics = [#tpu.dimension_semantics<parallel>, #tpu.dimension_semantics<arbitrary>], iteration_bounds = array<i64: 2, 1>, scalar_prefetch = 0 : i64, scratch_operands = 2 : i64, tpu.core_type = #tpu.core_type<tc>, window_params = [{transform_indices = @transform_0, window_bounds = array<i64: 1, 8, 8, 32>}, {pipeline_mode = #tpu.pipeline_mode<synchronous>, transform_indices = @transform_1, window_bounds = array<i64: 1, 32>}, {pipeline_mode = #tpu.pipeline_mode<synchronous>, transform_indices = @transform_2, window_bounds = array<i64: 1, 32>}, {pipeline_mode = #tpu.pipeline_mode<synchronous>, transform_indices = @transform_3, window_bounds = array<i64: 32, 32>}, {pipeline_mode = #tpu.pipeline_mode<synchronous>, transform_indices = @transform_4, window_bounds = array<i64: 32, 32>}, {transform_indices = @transform_5, window_bounds = array<i64: 288, 64>}, {transform_indices = @transform_6, window_bounds = array<i64: 1, 64>}, {transform_indices = @transform_7, window_bounds = array<i64: 1, 8, 8, 64>}]} {
    %c0_i32 = arith.constant 0 : i32
    %0 = arith.cmpi eq, %arg1, %c0_i32 : i32
    %1 = arith.extui %0 : i1 to i32
    %c0_i32_0 = arith.constant 0 : i32
    %2 = arith.cmpi ne, %1, %c0_i32_0 : i32
    scf.if %2 {
      %c0_10 = arith.constant 0 : index
      %c0_11 = arith.constant 0 : index
      %c0_12 = arith.constant 0 : index
      %c0_13 = arith.constant 0 : index
      %11 = vector.load %arg2[%c0_10, %c0_11, %c0_12, %c0_13] : memref<1x8x8x32xf32, #tpu.memory_space<vmem>>, vector<1x8x8x32xf32>
      %12 = vector.shape_cast %11 : vector<1x8x8x32xf32> to vector<64x32xf32>
      %cst_14 = arith.constant dense<0.000000e+00> : vector<32xf32>
      %13 = vector.multi_reduction <add>, %12, %cst_14 [0] : vector<64x32xf32> to vector<32xf32>
      %14 = vector.shape_cast %13 : vector<32xf32> to vector<1x32xf32>
      %15 = arith.mulf %12, %12 : vector<64x32xf32>
      %cst_15 = arith.constant dense<0.000000e+00> : vector<32xf32>
      %16 = vector.multi_reduction <add>, %15, %cst_15 [0] : vector<64x32xf32> to vector<32xf32>
      %17 = vector.shape_cast %16 : vector<32xf32> to vector<1x32xf32>
      %c0_16 = arith.constant 0 : index
      %c0_17 = arith.constant 0 : index
      %18 = vector.load %arg5[%c0_16, %c0_17] : memref<32x32xf32, #tpu.memory_space<vmem>>, vector<32x32xf32>
      %c0_18 = arith.constant 0 : index
      %c0_19 = arith.constant 0 : index
      %19 = vector.load %arg6[%c0_18, %c0_19] : memref<32x32xf32, #tpu.memory_space<vmem>>, vector<32x32xf32>
      %cst_20 = arith.constant dense<0.000000e+00> : vector<1x32xf32>
      %20 = tpu.matmul %14, %18, %cst_20 {dimension_numbers = #tpu.dot_dimension_numbers<[1], [0], [0], [1], [0, 0, 1, 1], [], []>} : vector<1x32xf32>, vector<32x32xf32>, vector<1x32xf32> -> vector<1x32xf32>
      %cst_21 = arith.constant 1.562500e-02 : f32
      %21 = vector.broadcast %cst_21 : f32 to vector<1x32xf32>
      %22 = arith.mulf %20, %21 : vector<1x32xf32>
      %cst_22 = arith.constant dense<0.000000e+00> : vector<1x32xf32>
      %23 = tpu.matmul %17, %18, %cst_22 {dimension_numbers = #tpu.dot_dimension_numbers<[1], [0], [0], [1], [0, 0, 1, 1], [], []>} : vector<1x32xf32>, vector<32x32xf32>, vector<1x32xf32> -> vector<1x32xf32>
      %cst_23 = arith.constant 1.562500e-02 : f32
      %24 = vector.broadcast %cst_23 : f32 to vector<1x32xf32>
      %25 = arith.mulf %23, %24 : vector<1x32xf32>
      %26 = arith.mulf %22, %22 : vector<1x32xf32>
      %27 = arith.subf %25, %26 : vector<1x32xf32>
      %cst_24 = arith.constant 9.99999997E-7 : f32
      %28 = vector.broadcast %cst_24 : f32 to vector<1x32xf32>
      %29 = arith.addf %27, %28 : vector<1x32xf32>
      %30 = math.rsqrt %29 : vector<1x32xf32>
      %cst_25 = arith.constant dense<0.000000e+00> : vector<1x32xf32>
      %31 = tpu.matmul %22, %19, %cst_25 {dimension_numbers = #tpu.dot_dimension_numbers<[1], [0], [0], [1], [0, 0, 1, 1], [], []>} : vector<1x32xf32>, vector<32x32xf32>, vector<1x32xf32> -> vector<1x32xf32>
      %cst_26 = arith.constant dense<0.000000e+00> : vector<1x32xf32>
      %32 = tpu.matmul %30, %19, %cst_26 {dimension_numbers = #tpu.dot_dimension_numbers<[1], [0], [0], [1], [0, 0, 1, 1], [], []>} : vector<1x32xf32>, vector<32x32xf32>, vector<1x32xf32> -> vector<1x32xf32>
      %33 = vector.broadcast %31 : vector<1x32xf32> to vector<64x32xf32>
      %34 = arith.subf %12, %33 : vector<64x32xf32>
      %c0_27 = arith.constant 0 : index
      %c0_28 = arith.constant 0 : index
      %35 = vector.load %arg3[%c0_27, %c0_28] : memref<1x32xf32, #tpu.memory_space<vmem>>, vector<1x32xf32>
      %36 = arith.mulf %32, %35 : vector<1x32xf32>
      %37 = vector.broadcast %36 : vector<1x32xf32> to vector<64x32xf32>
      %38 = arith.mulf %34, %37 : vector<64x32xf32>
      %c0_29 = arith.constant 0 : index
      %c0_30 = arith.constant 0 : index
      %39 = vector.load %arg4[%c0_29, %c0_30] : memref<1x32xf32, #tpu.memory_space<vmem>>, vector<1x32xf32>
      %40 = vector.broadcast %39 : vector<1x32xf32> to vector<64x32xf32>
      %41 = arith.addf %38, %40 : vector<64x32xf32>
      %42 = arith.negf %41 : vector<64x32xf32>
      %43 = math.exp %42 : vector<64x32xf32>
      %cst_31 = arith.constant 1.000000e+00 : f32
      %44 = vector.broadcast %cst_31 : f32 to vector<64x32xf32>
      %45 = arith.addf %44, %43 : vector<64x32xf32>
      %46 = arith.divf %44, %45 : vector<64x32xf32>
      %47 = arith.mulf %41, %46 : vector<64x32xf32>
      %cst_32 = arith.constant 0.000000e+00 : f32
      %48 = vector.broadcast %cst_32 : f32 to vector<10x10x32xf32>
      %c0_33 = arith.constant 0 : index
      %c0_34 = arith.constant 0 : index
      %c0_35 = arith.constant 0 : index
      %49 = vector.load %arg10[%c0_33, %c0_34, %c0_35] : memref<10x10x32xf32, #tpu.memory_space<vmem>>, vector<10x10x32xf32>
      tpu.vector_store %arg10[%c0_33, %c0_34, %c0_35], %48 {strides = array<i32>} : memref<10x10x32xf32, #tpu.memory_space<vmem>>, vector<10x10x32xf32>,
      %50 = vector.shape_cast %47 : vector<64x32xf32> to vector<8x8x32xf32>
      %c1 = arith.constant 1 : index
      %c1_36 = arith.constant 1 : index
      %c0_37 = arith.constant 0 : index
      %51 = vector.load %arg10[%c1, %c1_36, %c0_37] : memref<10x10x32xf32, #tpu.memory_space<vmem>>, vector<8x8x32xf32>
      tpu.vector_store %arg10[%c1, %c1_36, %c0_37], %50 {strides = array<i32>} : memref<10x10x32xf32, #tpu.memory_space<vmem>>, vector<8x8x32xf32>,
      %c0_38 = arith.constant 0 : index
      %c0_39 = arith.constant 0 : index
      %c0_40 = arith.constant 0 : index
      %52 = vector.load %arg10[%c0_38, %c0_39, %c0_40] : memref<10x10x32xf32, #tpu.memory_space<vmem>>, vector<10x10x32xf32>
      %53 = vector.extract_strided_slice %52 {offsets = [0, 0, 0], sizes = [8, 8, 32], strides = [1, 1, 1]} : vector<10x10x32xf32> to vector<8x8x32xf32>
      %54 = vector.shape_cast %53 : vector<8x8x32xf32> to vector<64x32xf32>
      %55 = vector.extract_strided_slice %52 {offsets = [0, 1, 0], sizes = [8, 8, 32], strides = [1, 1, 1]} : vector<10x10x32xf32> to vector<8x8x32xf32>
      %56 = vector.shape_cast %55 : vector<8x8x32xf32> to vector<64x32xf32>
      %57 = vector.extract_strided_slice %52 {offsets = [0, 2, 0], sizes = [8, 8, 32], strides = [1, 1, 1]} : vector<10x10x32xf32> to vector<8x8x32xf32>
      %58 = vector.shape_cast %57 : vector<8x8x32xf32> to vector<64x32xf32>
      %59 = vector.extract_strided_slice %52 {offsets = [1, 0, 0], sizes = [8, 8, 32], strides = [1, 1, 1]} : vector<10x10x32xf32> to vector<8x8x32xf32>
      %60 = vector.shape_cast %59 : vector<8x8x32xf32> to vector<64x32xf32>
      %61 = vector.extract_strided_slice %52 {offsets = [1, 1, 0], sizes = [8, 8, 32], strides = [1, 1, 1]} : vector<10x10x32xf32> to vector<8x8x32xf32>
      %62 = vector.shape_cast %61 : vector<8x8x32xf32> to vector<64x32xf32>
      %63 = vector.extract_strided_slice %52 {offsets = [1, 2, 0], sizes = [8, 8, 32], strides = [1, 1, 1]} : vector<10x10x32xf32> to vector<8x8x32xf32>
      %64 = vector.shape_cast %63 : vector<8x8x32xf32> to vector<64x32xf32>
      %65 = vector.extract_strided_slice %52 {offsets = [2, 0, 0], sizes = [8, 8, 32], strides = [1, 1, 1]} : vector<10x10x32xf32> to vector<8x8x32xf32>
      %66 = vector.shape_cast %65 : vector<8x8x32xf32> to vector<64x32xf32>
      %67 = vector.extract_strided_slice %52 {offsets = [2, 1, 0], sizes = [8, 8, 32], strides = [1, 1, 1]} : vector<10x10x32xf32> to vector<8x8x32xf32>
      %68 = vector.shape_cast %67 : vector<8x8x32xf32> to vector<64x32xf32>
      %69 = vector.extract_strided_slice %52 {offsets = [2, 2, 0], sizes = [8, 8, 32], strides = [1, 1, 1]} : vector<10x10x32xf32> to vector<8x8x32xf32>
      %70 = vector.shape_cast %69 : vector<8x8x32xf32> to vector<64x32xf32>
      %71 = tpu.concatenate %54, %56, %58, %60, %62, %64, %66, %68, %70 in 1 : vector<64x32xf32>, vector<64x32xf32>, vector<64x32xf32>, vector<64x32xf32>, vector<64x32xf32>, vector<64x32xf32>, vector<64x32xf32>, vector<64x32xf32>, vector<64x32xf32> -> vector<64x288xf32>
      %c0_41 = arith.constant 0 : index
      %c0_42 = arith.constant 0 : index
      %72 = vector.load %arg11[%c0_41, %c0_42] : memref<64x288xf32, #tpu.memory_space<vmem>>, vector<64x288xf32>
      tpu.vector_store %arg11[%c0_41, %c0_42], %71 {strides = array<i32>} : memref<64x288xf32, #tpu.memory_space<vmem>>, vector<64x288xf32>,
    } else {
    }
    %c0 = arith.constant 0 : index
    %c0_1 = arith.constant 0 : index
    %3 = vector.load %arg11[%c0, %c0_1] : memref<64x288xf32, #tpu.memory_space<vmem>>, vector<64x288xf32>
    %c0_2 = arith.constant 0 : index
    %c0_3 = arith.constant 0 : index
    %4 = vector.load %arg7[%c0_2, %c0_3] : memref<288x64xf32, #tpu.memory_space<vmem>>, vector<288x64xf32>
    %cst = arith.constant dense<0.000000e+00> : vector<64x64xf32>
    %5 = tpu.matmul %3, %4, %cst {dimension_numbers = #tpu.dot_dimension_numbers<[1], [0], [0], [1], [0, 0, 1, 1], [], []>} : vector<64x288xf32>, vector<288x64xf32>, vector<64x64xf32> -> vector<64x64xf32>
    %c0_4 = arith.constant 0 : index
    %c0_5 = arith.constant 0 : index
    %6 = vector.load %arg8[%c0_4, %c0_5] : memref<1x64xf32, #tpu.memory_space<vmem>>, vector<1x64xf32>
    %7 = vector.broadcast %6 : vector<1x64xf32> to vector<64x64xf32>
    %8 = arith.addf %5, %7 : vector<64x64xf32>
    %9 = vector.shape_cast %8 : vector<64x64xf32> to vector<1x8x8x64xf32>
    %c0_6 = arith.constant 0 : index
    %c0_7 = arith.constant 0 : index
    %c0_8 = arith.constant 0 : index
    %c0_9 = arith.constant 0 : index
    %10 = vector.load %arg9[%c0_6, %c0_7, %c0_8, %c0_9] : memref<1x8x8x64xf32, #tpu.memory_space<vmem>>, vector<1x8x8x64xf32>
    tpu.vector_store %arg9[%c0_6, %c0_7, %c0_8, %c0_9], %9 {strides = array<i32>} : memref<1x8x8x64xf32, #tpu.memory_space<vmem>>, vector<1x8x8x64xf32>,
    return
  }
  func.func @transform_0(%arg0: i32, %arg1: i32) -> (i32, i32, i32, i32) {
    %c0_i32 = arith.constant 0 : i32
    %c0_i32_0 = arith.constant 0 : i32
    %c0_i32_1 = arith.constant 0 : i32
    %c0_i32_2 = arith.constant 0 : i32
    return %arg0, %c0_i32, %c0_i32_0, %c0_i32_1 : i32, i32, i32, i32
  }
  func.func @transform_1(%arg0: i32, %arg1: i32) -> (i32, i32) {
    %c0_i32 = arith.constant 0 : i32
    %c0_i32_0 = arith.constant 0 : i32
    %c0_i32_1 = arith.constant 0 : i32
    return %c0_i32, %c0_i32_0 : i32, i32
  }
  func.func @transform_2(%arg0: i32, %arg1: i32) -> (i32, i32) {
    %c0_i32 = arith.constant 0 : i32
    %c0_i32_0 = arith.constant 0 : i32
    %c0_i32_1 = arith.constant 0 : i32
    return %c0_i32, %c0_i32_0 : i32, i32
  }
  func.func @transform_3(%arg0: i32, %arg1: i32) -> (i32, i32) {
    %c0_i32 = arith.constant 0 : i32
    %c0_i32_0 = arith.constant 0 : i32
    %c0_i32_1 = arith.constant 0 : i32
    return %c0_i32, %c0_i32_0 : i32, i32
  }
  func.func @transform_4(%arg0: i32, %arg1: i32) -> (i32, i32) {
    %c0_i32 = arith.constant 0 : i32
    %c0_i32_0 = arith.constant 0 : i32
    %c0_i32_1 = arith.constant 0 : i32
    return %c0_i32, %c0_i32_0 : i32, i32
  }
  func.func @transform_5(%arg0: i32, %arg1: i32) -> (i32, i32) {
    %c0_i32 = arith.constant 0 : i32
    %c0_i32_0 = arith.constant 0 : i32
    return %c0_i32, %arg1 : i32, i32
  }
  func.func @transform_6(%arg0: i32, %arg1: i32) -> (i32, i32) {
    %c0_i32 = arith.constant 0 : i32
    %c0_i32_0 = arith.constant 0 : i32
    return %c0_i32, %arg1 : i32, i32
  }
  func.func @transform_7(%arg0: i32, %arg1: i32) -> (i32, i32, i32, i32) {
    %c0_i32 = arith.constant 0 : i32
    %c0_i32_0 = arith.constant 0 : i32
    %c0_i32_1 = arith.constant 0 : i32
    return %arg0, %c0_i32, %c0_i32_0, %arg1 : i32, i32, i32, i32
  }
}

</mosaic_0001>

<llo_original>
// kernel: tpu_custom_call.1
$region0: #{tpu_custom_call.1}
  #allocation0 [shape = 'u32[]', space=smem, size = 0x4, offset = 0x4, fixed_abs, tag = 'smem constant byte address 0x4 - core index']
  #allocation1 [shape = 'u32[72,128]{1,0:T(1,128)}', space=vmem, size = 0x9000, scoped, tag = 'internal scratch']
  #allocation2 [shape = 'f32[10,10,32]{2,1,0:T(8,128)}', space=vmem, size = 0x14000, scoped, tag = 'scratch operand']
  #allocation3 [shape = 'f32[64,288]{1,0:T(8,128)}', space=vmem, size = 0x18000, scoped, tag = 'scratch operand']
  %s0 = inlined_call_operand.vmem [shape: f32[2,8,8,32], index: 0, kind: input, shape index: {}]
  %s1 = inlined_call_operand.vmem [shape: f32[1,32], index: 1, kind: input, shape index: {}]
  %s2 = inlined_call_operand.vmem [shape: f32[1,32], index: 2, kind: input, shape index: {}]
  %s3 = inlined_call_operand.vmem [shape: f32[32,32], index: 3, kind: input, shape index: {}]
  %s4 = inlined_call_operand.vmem [shape: f32[32,32], index: 4, kind: input, shape index: {}]
  %s5 = inlined_call_operand.vmem [shape: f32[288,64], index: 5, kind: input, shape index: {}]
  %s6 = inlined_call_operand.vmem [shape: f32[1,64], index: 6, kind: input, shape index: {}]
  %s7 = inlined_call_operand.hbm [shape: f32[2,8,8,64], index: 7, kind: output, shape index: {}]
  %s8 = sld [smem:[#allocation0]]
  $region65: #{tpu_custom_call.1} parent=0
    _
  %s10 = ssub.s32 1, %s8
  %s11 = scalar_select 0, %s10, %s8
  $region1: #{tpu_custom_call.1} parent=0
    #allocation4 [shape = 'u8[65536]{0}', space=vmem, size = 0x10000, scoped, tag = 'output window, operand 0']
    #allocation5 [shape = 's32[2]{0}', space=sflag, size = 0x8, scoped, tag = 'scoped memory for tpu_custom_call.1']
    %12 = vsyncpa [#allocation5], 0
    %s13 = scalar_lea.sflag [#allocation5], 1
    %14 = vsyncpa %s13, 0
    loop: start=0, step=1, limit=4
    $region2: #{tpu_custom_call.1} parent=1 // loop_pre_header
      _
    $region3: #{tpu_custom_call.1} parent=1 // loop_header
      %s16 = sphi 0, %s20
      %p17 = scmp.ge.s32.totalorder %s16, 4
      %s23 = sphi 0, %s35
      %s24 = sphi 0, %s31
      %s25 = sphi 0, %s23
      %s26 = sphi 0, %s24
      %s27 = sphi 0, %s25
      %s28 = sphi 0, %s26
      %s38 = sphi 0, %s40
      %s41 = sphi 0, %s38
      %s42 = sphi 0, %s41
      %s58 = sphi 0, %s42
      %s62 = sphi 0, %s62
      %s64 = sphi 0, %s62
      %s65 = sphi 0, %s64
      %s79 = sphi 0, %s65
      %s83 = sphi 0, %s83
      %s85 = sphi 0, %s83
      %s86 = sphi 0, %s85
      %s100 = sphi 0, %s86
      %s104 = sphi 0, %s104
      %s106 = sphi 0, %s104
      %s107 = sphi 0, %s106
      %s121 = sphi 0, %s107
      %s125 = sphi 0, %s125
      %s127 = sphi 0, %s125
      %s128 = sphi 0, %s127
      %s142 = sphi 0, %s128
      %s148 = sphi 0, %s150
      %s151 = sphi 0, %s148
      %s152 = sphi 0, %s151
      %s168 = sphi 0, %s152
      %s174 = sphi 0, %s176
      %s177 = sphi 0, %s174
      %s178 = sphi 0, %s177
      %s194 = sphi 0, %s178
      %s202 = sphi 0, %s204
      %s205 = sphi 0, %s202
      %s206 = sphi 0, %s205
      %s222 = sphi 0, %s206
    $region4: #{tpu_custom_call.1} parent=1 // loop_header_branch
      %19 = sbr.rel (%p17) target = $region8
    $region5: #{tpu_custom_call.1} parent=1 // loop_body
      %s21 = ssub.s32 %s16, 1
      %s22 = ssub.s32 %s16, 2
      %s29 = sadd.s32 1, %s24
      %p30 = scmp.ge.s32.totalorder %s29, 1
      %s31 = scalar_select %p30, 0, %s29
      %s32 = sadd.s32 1, %s23
      %s33 = scalar_select %p30, %s32, %s23
      %p34 = scmp.ge.s32.totalorder %s33, 2
      %s35 = scalar_select %p34, 0, %s33
      %s36 = ssub.s32 %s23, %s35
      %p37 = scmp.eq.s32.totalorder %s36, 0
      %s39 = sadd.s32 %s38, 1
      %s40 = scalar_select %p37, %s38, %s39
      %p43 = pneg %p37
      %p44 = scmp.eq.s32.totalorder %s16, 1
      %p45 = por %p43, %p44
      %p46 = scmp.ne.s32.totalorder %s38, %s41
      %p47 = scmp.eq.s32.totalorder %s16, 0
      %p48 = por %p46, %p47
      %p49 = scmp.ne.s32.totalorder %s38, %s41
      %p50 = scmp.eq.s32.totalorder %s21, 1
      %p51 = por %p49, %p50
      %p52 = scmp.ne.s32.totalorder %s41, %s42
      %p53 = scmp.eq.s32.totalorder %s21, 0
      %p54 = por %p52, %p53
      %p55 = scmp.ne.s32.totalorder %s41, %s42
      %p56 = scmp.eq.s32.totalorder %s22, 1
      %p57 = por %p55, %p56
      %p59 = scmp.ne.s32.totalorder %s42, %s58
      %p60 = scmp.eq.s32.totalorder %s22, 0
      %p61 = por %p59, %p60
      %s63 = sadd.s32 %s62, 1
      %p66 = scmp.eq.s32.totalorder %s16, 1
      %p67 = scmp.ne.s32.totalorder %s62, %s64
      %p68 = scmp.eq.s32.totalorder %s16, 0
      %p69 = por %p67, %p68
      %p70 = scmp.ne.s32.totalorder %s62, %s64
      %p71 = scmp.eq.s32.totalorder %s21, 1
      %p72 = por %p70, %p71
      %p73 = scmp.ne.s32.totalorder %s64, %s65
      %p74 = scmp.eq.s32.totalorder %s21, 0
      %p75 = por %p73, %p74
      %p76 = scmp.ne.s32.totalorder %s64, %s65
      %p77 = scmp.eq.s32.totalorder %s22, 1
      %p78 = por %p76, %p77
      %p80 = scmp.ne.s32.totalorder %s65, %s79
      %p81 = scmp.eq.s32.totalorder %s22, 0
      %p82 = por %p80, %p81
      %s84 = sadd.s32 %s83, 1
      %p87 = scmp.eq.s32.totalorder %s16, 1
      %p88 = scmp.ne.s32.totalorder %s83, %s85
      %p89 = scmp.eq.s32.totalorder %s16, 0
      %p90 = por %p88, %p89
      %p91 = scmp.ne.s32.totalorder %s83, %s85
      %p92 = scmp.eq.s32.totalorder %s21, 1
      %p93 = por %p91, %p92
      %p94 = scmp.ne.s32.totalorder %s85, %s86
      %p95 = scmp.eq.s32.totalorder %s21, 0
      %p96 = por %p94, %p95
      %p97 = scmp.ne.s32.totalorder %s85, %s86
      %p98 = scmp.eq.s32.totalorder %s22, 1
      %p99 = por %p97, %p98
      %p101 = scmp.ne.s32.totalorder %s86, %s100
      %p102 = scmp.eq.s32.totalorder %s22, 0
      %p103 = por %p101, %p102
      %s105 = sadd.s32 %s104, 1
      %p108 = scmp.eq.s32.totalorder %s16, 1
      %p109 = scmp.ne.s32.totalorder %s104, %s106
      %p110 = scmp.eq.s32.totalorder %s16, 0
      %p111 = por %p109, %p110
      %p112 = scmp.ne.s32.totalorder %s104, %s106
      %p113 = scmp.eq.s32.totalorder %s21, 1
      %p114 = por %p112, %p113
      %p115 = scmp.ne.s32.totalorder %s106, %s107
      %p116 = scmp.eq.s32.totalorder %s21, 0
      %p117 = por %p115, %p116
      %p118 = scmp.ne.s32.totalorder %s106, %s107
      %p119 = scmp.eq.s32.totalorder %s22, 1
      %p120 = por %p118, %p119
      %p122 = scmp.ne.s32.totalorder %s107, %s121
      %p123 = scmp.eq.s32.totalorder %s22, 0
      %p124 = por %p122, %p123
      %s126 = sadd.s32 %s125, 1
      %p129 = scmp.eq.s32.totalorder %s16, 1
      %p130 = scmp.ne.s32.totalorder %s125, %s127
      %p131 = scmp.eq.s32.totalorder %s16, 0
      %p132 = por %p130, %p131
      %p133 = scmp.ne.s32.totalorder %s125, %s127
      %p134 = scmp.eq.s32.totalorder %s21, 1
      %p135 = por %p133, %p134
      %p136 = scmp.ne.s32.totalorder %s127, %s128
      %p137 = scmp.eq.s32.totalorder %s21, 0
      %p138 = por %p136, %p137
      %p139 = scmp.ne.s32.totalorder %s127, %s128
      %p140 = scmp.eq.s32.totalorder %s22, 1
      %p141 = por %p139, %p140
      %p143 = scmp.ne.s32.totalorder %s128, %s142
      %p144 = scmp.eq.s32.totalorder %s22, 0
      %p145 = por %p143, %p144
      %s146 = ssub.s32 %s24, %s31
      %p147 = scmp.eq.s32.totalorder %s146, 0
      %s149 = sadd.s32 %s148, 1
      %s150 = scalar_select %p147, %s148, %s149
      %p153 = pneg %p147
      %p154 = scmp.eq.s32.totalorder %s16, 1
      %p155 = por %p153, %p154
      %p156 = scmp.ne.s32.totalorder %s148, %s151
      %p157 = scmp.eq.s32.totalorder %s16, 0
      %p158 = por %p156, %p157
      %p159 = scmp.ne.s32.totalorder %s148, %s151
      %p160 = scmp.eq.s32.totalorder %s21, 1
      %p161 = por %p159, %p160
      %p162 = scmp.ne.s32.totalorder %s151, %s152
      %p163 = scmp.eq.s32.totalorder %s21, 0
      %p164 = por %p162, %p163
      %p165 = scmp.ne.s32.totalorder %s151, %s152
      %p166 = scmp.eq.s32.totalorder %s22, 1
      %p167 = por %p165, %p166
      %p169 = scmp.ne.s32.totalorder %s152, %s168
      %p170 = scmp.eq.s32.totalorder %s22, 0
      %p171 = por %p169, %p170
      %s172 = ssub.s32 %s24, %s31
      %p173 = scmp.eq.s32.totalorder %s172, 0
      %s175 = sadd.s32 %s174, 1
      %s176 = scalar_select %p173, %s174, %s175
      %p179 = pneg %p173
      %p180 = scmp.eq.s32.totalorder %s16, 1
      %p181 = por %p179, %p180
      %p182 = scmp.ne.s32.totalorder %s174, %s177
      %p183 = scmp.eq.s32.totalorder %s16, 0
      %p184 = por %p182, %p183
      %p185 = scmp.ne.s32.totalorder %s174, %s177
      %p186 = scmp.eq.s32.totalorder %s21, 1
      %p187 = por %p185, %p186
      %p188 = scmp.ne.s32.totalorder %s177, %s178
      %p189 = scmp.eq.s32.totalorder %s21, 0
      %p190 = por %p188, %p189
      %p191 = scmp.ne.s32.totalorder %s177, %s178
      %p192 = scmp.eq.s32.totalorder %s22, 1
      %p193 = por %p191, %p192
      %p195 = scmp.ne.s32.totalorder %s178, %s194
      %p196 = scmp.eq.s32.totalorder %s22, 0
      %p197 = por %p195, %p196
      %s198 = ssub.s32 %s23, %s35
      %s199 = ssub.s32 %s24, %s31
      %s200 = sor.u32 %s198, %s199
      %p201 = scmp.eq.s32.totalorder %s200, 0
      %s203 = sadd.s32 %s202, 1
      %s204 = scalar_select %p201, %s202, %s203
      %p207 = pneg %p201
      %p208 = scmp.eq.s32.totalorder %s16, 1
      %p209 = por %p207, %p208
      %p210 = scmp.ne.s32.totalorder %s202, %s205
      %p211 = scmp.eq.s32.totalorder %s16, 0
      %p212 = por %p210, %p211
      %p213 = scmp.ne.s32.totalorder %s202, %s205
      %p214 = scmp.eq.s32.totalorder %s21, 1
      %p215 = por %p213, %p214
      %p216 = scmp.ne.s32.totalorder %s205, %s206
      %p217 = scmp.eq.s32.totalorder %s21, 0
      %p218 = por %p216, %p217
      %p219 = scmp.ne.s32.totalorder %s205, %s206
      %p220 = scmp.eq.s32.totalorder %s22, 1
      %p221 = por %p219, %p220
      %p223 = scmp.ne.s32.totalorder %s206, %s222
      %p224 = scmp.eq.s32.totalorder %s22, 0
      %p225 = por %p223, %p224
      %p226 = scmp.le.s32.totalorder 1, %s16
      %p227 = scmp.lt.s32.totalorder %s16, 3
      %p228 = pnand %p226, %p227
      %p229 = pneg %p228
      // Predicated region
      $region9: #{tpu_custom_call.1} parent=5 // pred_check
        _
      $region10: #{tpu_custom_call.1} parent=5 // pred_check_branch
        %231 = sbr.rel (%p228) target = $region12
      $region11: #{tpu_custom_call.1} parent=5 // pred_region
        %s232 = ssub.s32 %s16, 1
        // Predicated region
        $region13: #{tpu_custom_call.1} parent=11 // pred_check
          %p233 = pneg %p75
        $region14: #{tpu_custom_call.1} parent=11 // pred_check_branch
          %235 = sbr.rel (%p233) target = $region16
        $region15: #{tpu_custom_call.1} parent=11 // pred_region
          _
        $region16: #{tpu_custom_call.1} parent=11 // pred_fallthru
          _
        // Predicated region
        $region17: #{tpu_custom_call.1} parent=11 // pred_check
          %p236 = pneg %p96
        $region18: #{tpu_custom_call.1} parent=11 // pred_check_branch
          %238 = sbr.rel (%p236) target = $region20
        $region19: #{tpu_custom_call.1} parent=11 // pred_region
          _
        $region20: #{tpu_custom_call.1} parent=11 // pred_fallthru
          _
        // Predicated region
        $region21: #{tpu_custom_call.1} parent=11 // pred_check
          %p239 = pneg %p117
        $region22: #{tpu_custom_call.1} parent=11 // pred_check_branch
          %241 = sbr.rel (%p239) target = $region24
        $region23: #{tpu_custom_call.1} parent=11 // pred_region
          _
        $region24: #{tpu_custom_call.1} parent=11 // pred_fallthru
          _
        // Predicated region
        $region25: #{tpu_custom_call.1} parent=11 // pred_check
          %p242 = pneg %p138
        $region26: #{tpu_custom_call.1} parent=11 // pred_check_branch
          %244 = sbr.rel (%p242) target = $region28
        $region27: #{tpu_custom_call.1} parent=11 // pred_region
          _
        $region28: #{tpu_custom_call.1} parent=11 // pred_fallthru
          _
        // Predicated region
        $region29: #{tpu_custom_call.1} parent=11 // pred_check
          %p245 = pneg %p164
        $region30: #{tpu_custom_call.1} parent=11 // pred_check_branch
          %247 = sbr.rel (%p245) target = $region32
        $region31: #{tpu_custom_call.1} parent=11 // pred_region
          %p248 = scmp.lt.s32.totalorder %s26, 0
          %s249 = scalar_select %p248, %s26, 0
          %s250 = smul.addr %s249, 8
          %s251 = scalar_lea.vmem %s5, %s250
        $region32: #{tpu_custom_call.1} parent=11 // pred_fallthru
          _
        // Predicated region
        $region33: #{tpu_custom_call.1} parent=11 // pred_check
          %p252 = pneg %p190
        $region34: #{tpu_custom_call.1} parent=11 // pred_check_branch
          %254 = sbr.rel (%p252) target = $region36
        $region35: #{tpu_custom_call.1} parent=11 // pred_region
          %p255 = scmp.lt.s32.totalorder %s26, 0
          %s256 = scalar_select %p255, %s26, 0
          %s257 = scalar_lea.vmem %s6, %s256
        $region36: #{tpu_custom_call.1} parent=11 // pred_fallthru
          _
      $region12: #{tpu_custom_call.1} parent=5 // pred_fallthru
        _
      %p258 = scmp.lt.s32.totalorder %s16, 2
      // Predicated region
      $region37: #{tpu_custom_call.1} parent=5 // pred_check
        %p259 = pneg %p258
      $region38: #{tpu_custom_call.1} parent=5 // pred_check_branch
        %261 = sbr.rel (%p259) target = $region40
      $region39: #{tpu_custom_call.1} parent=5 // pred_region
        // Predicated region
        $region41: #{tpu_custom_call.1} parent=39 // pred_check
          %p262 = pneg %p48
        $region42: #{tpu_custom_call.1} parent=39 // pred_check_branch
          %264 = sbr.rel (%p262) target = $region44
        $region43: #{tpu_custom_call.1} parent=39 // pred_region
          %p265 = scmp.lt.s32.totalorder %s23, 1
          %s266 = scalar_select %p265, %s23, 1
          %s267 = smul.addr %s266, 8
          %s268 = smul.addr %s267, 8
          %s269 = scalar_lea.vmem %s0, %s268
        $region44: #{tpu_custom_call.1} parent=39 // pred_fallthru
          _
      $region40: #{tpu_custom_call.1} parent=5 // pred_fallthru
        _
      %p270 = scmp.le.s32.totalorder 1, %s16
      %p271 = scmp.lt.s32.totalorder %s16, 3
      %p272 = pnand %p270, %p271
      %p273 = pneg %p272
      // Predicated region
      $region45: #{tpu_custom_call.1} parent=5 // pred_check
        _
      $region46: #{tpu_custom_call.1} parent=5 // pred_check_branch
        %275 = sbr.rel (%p272) target = $region48
      $region47: #{tpu_custom_call.1} parent=5 // pred_region
        %s276 = ssub.s32 %s16, 1
        %p277 = scmp.lt.s32.totalorder %s25, 1
        %s278 = scalar_select %p277, %s25, 1
        %s279 = smul.addr %s278, 8
        %s280 = smul.addr %s279, 8
        %s281 = scalar_lea.vmem %s0, %s280
        %p282 = pneg %p54
        %p283 = pneg %p51
        %p284 = pneg %p75
        %p285 = pneg %p72
        %p286 = pneg %p96
        %p287 = pneg %p93
        %p288 = pneg %p117
        %p289 = pneg %p114
        %p290 = pneg %p138
        %p291 = pneg %p135
        %p292 = scmp.lt.s32.totalorder %s26, 0
        %s293 = scalar_select %p292, %s26, 0
        %s294 = smul.addr %s293, 8
        %s295 = scalar_lea.vmem %s5, %s294
        %p296 = pneg %p164
        %p297 = pneg %p161
        %p298 = scmp.lt.s32.totalorder %s26, 0
        %s299 = scalar_select %p298, %s26, 0
        %s300 = scalar_lea.vmem %s6, %s299
        %p301 = pneg %p190
        %p302 = pneg %p187
        %p303 = pneg %p218
        %p304 = pneg %p215
        %s305 = sand.u32 %s205, 1
        %s306 = scalar_lea.sflag [#allocation5], %s305
        %s307 = sand.u32 %s205, 1
        %s308 = smul.addr %s307, 64
        %s309 = scalar_lea.vmem [#allocation4], %s308
        %p310 = scmp.lt.s32.totalorder %s25, 1
        %s311 = scalar_select %p310, %s25, 1
        %s312 = smul.addr %s311, 8
        %s313 = smul.addr %s312, 8
        %s314 = scalar_lea.vmem %s0, %s313
        %p315 = scmp.lt.s32.totalorder %s26, 0
        %s316 = scalar_select %p315, %s26, 0
        %s317 = smul.addr %s316, 8
        %s318 = scalar_lea.vmem %s5, %s317
        %p319 = scmp.lt.s32.totalorder %s26, 0
        %s320 = scalar_select %p319, %s26, 0
        %s321 = scalar_lea.vmem %s6, %s320
        %p322 = scmp.eq.s32.totalorder %s26, 0
        // Predicated region
        $region49: #{tpu_custom_call.1} parent=47 // pred_check
          %p323 = pneg %p322
        $region50: #{tpu_custom_call.1} parent=47 // pred_check_branch
          %325 = sbr.rel (%p323) target = $region52
        $region51: #{tpu_custom_call.1} parent=47 // pred_region
          %v326 = vld [vmem:[%s314] sm:$0xff]
          %v327 = vld [vmem:[%s314 + $0x8] sm:$0xff]
          %v328 = vld [vmem:[%s314 + $0x10] sm:$0xff]
          %v329 = vld [vmem:[%s314 + $0x18] sm:$0xff]
          %v330 = vld [vmem:[%s314 + $0x20] sm:$0xff]
          %v331 = vld [vmem:[%s314 + $0x28] sm:$0xff]
          %v332 = vld [vmem:[%s314 + $0x30] sm:$0xff]
          %v333 = vld [vmem:[%s314 + $0x38] sm:$0xff]
          %vm334 = vcmask 261120
          %v335 = vsel %vm334, %v326, 0.0
          %v336 = vsel %vm334, %v327, 0.0
          %v337 = vadd.f32 %v335, %v336
          %v338 = vsel %vm334, %v328, 0.0
          %v339 = vadd.f32 %v337, %v338
          %v340 = vsel %vm334, %v329, 0.0
          %v341 = vadd.f32 %v339, %v340
          %v342 = vsel %vm334, %v330, 0.0
          %v343 = vadd.f32 %v341, %v342
          %v344 = vsel %vm334, %v331, 0.0
          %v345 = vadd.f32 %v343, %v344
          %v346 = vsel %vm334, %v332, 0.0
          %v347 = vadd.f32 %v345, %v346
          %v348 = vsel %vm334, %v333, 0.0
          %v349 = vadd.f32 %v347, %v348
          %v350 = vrot.slane %v349, 4
          %v351 = vadd.f32 %v349, %v350
          %v352 = vrot.slane %v351, 2
          %v353 = vadd.f32 %v351, %v352
          %v354 = vrot.slane %v353, 1
          %v355 = vadd.f32 %v353, %v354
          %v356 = vmul.f32 %v326, %v326
          %v357 = vmul.f32 %v327, %v327
          %v358 = vmul.f32 %v328, %v328
          %v359 = vmul.f32 %v329, %v329
          %v360 = vmul.f32 %v330, %v330
          %v361 = vmul.f32 %v331, %v331
          %v362 = vmul.f32 %v332, %v332
          %v363 = vmul.f32 %v333, %v333
          %v364 = vsel %vm334, %v356, 0.0
          %v365 = vsel %vm334, %v357, 0.0
          %v366 = vadd.f32 %v364, %v365
          %v367 = vsel %vm334, %v358, 0.0
          %v368 = vadd.f32 %v366, %v367
          %v369 = vsel %vm334, %v359, 0.0
          %v370 = vadd.f32 %v368, %v369
          %v371 = vsel %vm334, %v360, 0.0
          %v372 = vadd.f32 %v370, %v371
          %v373 = vsel %vm334, %v361, 0.0
          %v374 = vadd.f32 %v372, %v373
          %v375 = vsel %vm334, %v362, 0.0
          %v376 = vadd.f32 %v374, %v375
          %v377 = vsel %vm334, %v363, 0.0
          %v378 = vadd.f32 %v376, %v377
          %v379 = vrot.slane %v378, 4
          %v380 = vadd.f32 %v378, %v379
          %v381 = vrot.slane %v380, 2
          %v382 = vadd.f32 %v380, %v381
          %v383 = vrot.slane %v382, 1
          %v384 = vadd.f32 %v382, %v383
          %v385 = vld [vmem:[%s3] sm:$0xff]
          %v386 = vld [vmem:[%s3 + $0x8] sm:$0xff]
          %v387 = vld [vmem:[%s3 + $0x10] sm:$0xff]
          %v388 = vld [vmem:[%s3 + $0x18] sm:$0xff]
          %v389 = vld [vmem:[%s4] sm:$0xff]
          %v390 = vld [vmem:[%s4 + $0x8] sm:$0xff]
          %v391 = vld [vmem:[%s4 + $0x10] sm:$0xff]
          %v392 = vld [vmem:[%s4 + $0x18] sm:$0xff]
          %v394 = vsel %vm334, %v355, 0
          %396 = vmatpush.msra.mxu0 0.0
          %397 = vmatpush.msra.mxu0 0.0
          %398 = vmatpush.msra.mxu0 0.0
          %399 = vmatpush.msra.mxu0 0.0
          %400 = vmatpush.msra.mxu0 0.0
          %401 = vmatpush.msra.mxu0 0.0
          %402 = vmatpush.msra.mxu0 0.0
          %403 = vmatpush.msra.mxu0 0.0
          %404 = vmatpush.msra.mxu0 0.0
          %405 = vmatpush.msra.mxu0 0.0
          %406 = vmatpush.msra.mxu0 0.0
          %407 = vmatpush.msra.mxu0 0.0
          %408 = vmatpush.msra.mxu0 %v388
          %409 = vmatpush.msra.mxu0 %v387
          %410 = vmatpush.msra.mxu0 %v386
          %411 = vmatpush.msra.mxu0 %v385
          %412 = vmatmul.f32.gmra.mxu0 %v394
          %v413 = vpop.f32.mrf.mxu0
          %v414 = vadd.f32 0.0, %v413
          %415 = vdwg.mxu0
          %v416 = vmul.f32 %v414, 0.015625
          %v418 = vsel %vm334, %v384, 0
          %420 = vmatpush.msra.mxu0 0.0
          %421 = vmatpush.msra.mxu0 0.0
          %422 = vmatpush.msra.mxu0 0.0
          %423 = vmatpush.msra.mxu0 0.0
          %424 = vmatpush.msra.mxu0 0.0
          %425 = vmatpush.msra.mxu0 0.0
          %426 = vmatpush.msra.mxu0 0.0
          %427 = vmatpush.msra.mxu0 0.0
          %428 = vmatpush.msra.mxu0 0.0
          %429 = vmatpush.msra.mxu0 0.0
          %430 = vmatpush.msra.mxu0 0.0
          %431 = vmatpush.msra.mxu0 0.0
          %432 = vmatpush.msra.mxu0 %v388
          %433 = vmatpush.msra.mxu0 %v387
          %434 = vmatpush.msra.mxu0 %v386
          %435 = vmatpush.msra.mxu0 %v385
          %436 = vmatmul.f32.gmra.mxu0 %v418
          %v437 = vpop.f32.mrf.mxu0
          %v438 = vadd.f32 0.0, %v437
          %439 = vdwg.mxu0
          %v440 = vmul.f32 %v438, 0.015625
          %v441 = vmul.f32 %v416, %v416
          %v442 = vsub.f32 %v440, %v441
          %v443 = vadd.f32 %v442, 1e-06
          %v444 = vrsqrt.pop %v443
          %v445 = vmul.f32 %v444, %v443
          %v446 = vmul.f32 %v445, %v444
          %v447 = vmul.f32 0.5, %v446
          %v448 = vsub.f32 1.5, %v447
          %v449 = vmul.f32 %v444, %v448
          %vm450 = vweird.f32 %v443
          %vm451 = vweird.f32 %v444
          %vm452 = vmor %vm450, %vm451
          %v453 = vsel %vm452, %v444, %v449
          %v455 = vsel %vm334, %v416, 0
          %457 = vmatpush.msra.mxu0 0.0
          %458 = vmatpush.msra.mxu0 0.0
          %459 = vmatpush.msra.mxu0 0.0
          %460 = vmatpush.msra.mxu0 0.0
          %461 = vmatpush.msra.mxu0 0.0
          %462 = vmatpush.msra.mxu0 0.0
          %463 = vmatpush.msra.mxu0 0.0
          %464 = vmatpush.msra.mxu0 0.0
          %465 = vmatpush.msra.mxu0 0.0
          %466 = vmatpush.msra.mxu0 0.0
          %467 = vmatpush.msra.mxu0 0.0
          %468 = vmatpush.msra.mxu0 0.0
          %469 = vmatpush.msra.mxu0 %v392
          %470 = vmatpush.msra.mxu0 %v391
          %471 = vmatpush.msra.mxu0 %v390
          %472 = vmatpush.msra.mxu0 %v389
          %473 = vmatmul.f32.gmra.mxu0 %v455
          %v474 = vpop.f32.mrf.mxu0
          %v475 = vadd.f32 0.0, %v474
          %476 = vdwg.mxu0
          %v478 = vsel %vm334, %v453, 0
          %480 = vmatpush.msra.mxu0 0.0
          %481 = vmatpush.msra.mxu0 0.0
          %482 = vmatpush.msra.mxu0 0.0
          %483 = vmatpush.msra.mxu0 0.0
          %484 = vmatpush.msra.mxu0 0.0
          %485 = vmatpush.msra.mxu0 0.0
          %486 = vmatpush.msra.mxu0 0.0
          %487 = vmatpush.msra.mxu0 0.0
          %488 = vmatpush.msra.mxu0 0.0
          %489 = vmatpush.msra.mxu0 0.0
          %490 = vmatpush.msra.mxu0 0.0
          %491 = vmatpush.msra.mxu0 0.0
          %492 = vmatpush.msra.mxu0 %v392
          %493 = vmatpush.msra.mxu0 %v391
          %494 = vmatpush.msra.mxu0 %v390
          %495 = vmatpush.msra.mxu0 %v389
          %496 = vmatmul.f32.gmra.mxu0 %v478
          %v497 = vpop.f32.mrf.mxu0
          %v498 = vadd.f32 0.0, %v497
          %499 = vdwg.mxu0
          %v500 = vperm.slane %v475, 0
          %v501 = vsub.f32 %v326, %v500
          %v502 = vsub.f32 %v327, %v500
          %v503 = vsub.f32 %v328, %v500
          %v504 = vsub.f32 %v329, %v500
          %v505 = vsub.f32 %v330, %v500
          %v506 = vsub.f32 %v331, %v500
          %v507 = vsub.f32 %v332, %v500
          %v508 = vsub.f32 %v333, %v500
          %v509 = vld [vmem:[%s1] sm:$0x1]
          %v510 = vmul.f32 %v498, %v509
          %v511 = vperm.slane %v510, 0
          %v512 = vmul.f32 %v501, %v511
          %v513 = vmul.f32 %v502, %v511
          %v514 = vmul.f32 %v503, %v511
          %v515 = vmul.f32 %v504, %v511
          %v516 = vmul.f32 %v505, %v511
          %v517 = vmul.f32 %v506, %v511
          %v518 = vmul.f32 %v507, %v511
          %v519 = vmul.f32 %v508, %v511
          %v520 = vld [vmem:[%s2] sm:$0x1]
          %v522 = vperm.slane %v520, 0
          %v524 = vadd.f32 %v512, %v522
          %v525 = vadd.f32 %v513, %v522
          %v526 = vadd.f32 %v514, %v522
          %v527 = vadd.f32 %v515, %v522
          %v528 = vadd.f32 %v516, %v522
          %v529 = vadd.f32 %v517, %v522
          %v530 = vadd.f32 %v518, %v522
          %v531 = vadd.f32 %v519, %v522
          %v532 = vxor.u32 %v524, 2147483648
          %v533 = vxor.u32 %v525, 2147483648
          %v534 = vxor.u32 %v526, 2147483648
          %v535 = vxor.u32 %v527, 2147483648
          %v536 = vxor.u32 %v528, 2147483648
          %v537 = vxor.u32 %v529, 2147483648
          %v538 = vxor.u32 %v530, 2147483648
          %v539 = vxor.u32 %v531, 2147483648
          %v540 = vmul.f32 %v532, 1.442695
          %v541 = vpow.pop %v540
          %v542 = vmul.f32 %v533, 1.442695
          %v543 = vpow.pop %v542
          %v544 = vmul.f32 %v534, 1.442695
          %v545 = vpow.pop %v544
          %v546 = vmul.f32 %v535, 1.442695
          %v547 = vpow.pop %v546
          %v548 = vmul.f32 %v536, 1.442695
          %v549 = vpow.pop %v548
          %v550 = vmul.f32 %v537, 1.442695
          %v551 = vpow.pop %v550
          %v552 = vmul.f32 %v538, 1.442695
          %v553 = vpow.pop %v552
          %v554 = vmul.f32 %v539, 1.442695
          %v555 = vpow.pop %v554
          %v556 = vadd.f32 %v541, 1.0
          %v557 = vadd.f32 %v543, 1.0
          %v558 = vadd.f32 %v545, 1.0
          %v559 = vadd.f32 %v547, 1.0
          %v560 = vadd.f32 %v549, 1.0
          %v561 = vadd.f32 %v551, 1.0
          %v562 = vadd.f32 %v553, 1.0
          %v563 = vadd.f32 %v555, 1.0
          %v564 = vrcp.pop %v556
          %v565 = vmul.f32 %v556, %v564
          %v566 = vsub.f32 1.0, %v565
          %v567 = vmul.f32 %v564, %v566
          %v568 = vadd.f32 %v564, %v567
          %vm569 = vweird.f32 %v556
          %vm570 = vweird.f32 %v564
          %vm571 = vmor %vm569, %vm570
          %v572 = vsel %vm571, %v564, %v568
          %v573 = vand.u32 2147483647, %v556
          %vm574 = vcmp.eq.f32.partialorder %v573, 8.507059e+37
          %v575 = vand.u32 %v556, 2147483648
          %v576 = vor.u32 1.1754944e-38, %v575
          %v577 = vsel %vm574, %v576, %v572
          %v578 = vmul.f32 1.0, %v577
          %v579 = vrcp.pop %v557
          %v580 = vmul.f32 %v557, %v579
          %v581 = vsub.f32 1.0, %v580
          %v582 = vmul.f32 %v579, %v581
          %v583 = vadd.f32 %v579, %v582
          %vm584 = vweird.f32 %v557
          %vm585 = vweird.f32 %v579
          %vm586 = vmor %vm584, %vm585
          %v587 = vsel %vm586, %v579, %v583
          %v588 = vand.u32 2147483647, %v557
          %vm589 = vcmp.eq.f32.partialorder %v588, 8.507059e+37
          %v590 = vand.u32 %v557, 2147483648
          %v591 = vor.u32 1.1754944e-38, %v590
          %v592 = vsel %vm589, %v591, %v587
          %v593 = vmul.f32 1.0, %v592
          %v594 = vrcp.pop %v558
          %v595 = vmul.f32 %v558, %v594
          %v596 = vsub.f32 1.0, %v595
          %v597 = vmul.f32 %v594, %v596
          %v598 = vadd.f32 %v594, %v597
          %vm599 = vweird.f32 %v558
          %vm600 = vweird.f32 %v594
          %vm601 = vmor %vm599, %vm600
          %v602 = vsel %vm601, %v594, %v598
          %v603 = vand.u32 2147483647, %v558
          %vm604 = vcmp.eq.f32.partialorder %v603, 8.507059e+37
          %v605 = vand.u32 %v558, 2147483648
          %v606 = vor.u32 1.1754944e-38, %v605
          %v607 = vsel %vm604, %v606, %v602
          %v608 = vmul.f32 1.0, %v607
          %v609 = vrcp.pop %v559
          %v610 = vmul.f32 %v559, %v609
          %v611 = vsub.f32 1.0, %v610
          %v612 = vmul.f32 %v609, %v611
          %v613 = vadd.f32 %v609, %v612
          %vm614 = vweird.f32 %v559
          %vm615 = vweird.f32 %v609
          %vm616 = vmor %vm614, %vm615
          %v617 = vsel %vm616, %v609, %v613
          %v618 = vand.u32 2147483647, %v559
          %vm619 = vcmp.eq.f32.partialorder %v618, 8.507059e+37
          %v620 = vand.u32 %v559, 2147483648
          %v621 = vor.u32 1.1754944e-38, %v620
          %v622 = vsel %vm619, %v621, %v617
          %v623 = vmul.f32 1.0, %v622
          %v624 = vrcp.pop %v560
          %v625 = vmul.f32 %v560, %v624
          %v626 = vsub.f32 1.0, %v625
          %v627 = vmul.f32 %v624, %v626
          %v628 = vadd.f32 %v624, %v627
          %vm629 = vweird.f32 %v560
          %vm630 = vweird.f32 %v624
          %vm631 = vmor %vm629, %vm630
          %v632 = vsel %vm631, %v624, %v628
          %v633 = vand.u32 2147483647, %v560
          %vm634 = vcmp.eq.f32.partialorder %v633, 8.507059e+37
          %v635 = vand.u32 %v560, 2147483648
          %v636 = vor.u32 1.1754944e-38, %v635
          %v637 = vsel %vm634, %v636, %v632
          %v638 = vmul.f32 1.0, %v637
          %v639 = vrcp.pop %v561
          %v640 = vmul.f32 %v561, %v639
          %v641 = vsub.f32 1.0, %v640
          %v642 = vmul.f32 %v639, %v641
          %v643 = vadd.f32 %v639, %v642
          %vm644 = vweird.f32 %v561
          %vm645 = vweird.f32 %v639
          %vm646 = vmor %vm644, %vm645
          %v647 = vsel %vm646, %v639, %v643
          %v648 = vand.u32 2147483647, %v561
          %vm649 = vcmp.eq.f32.partialorder %v648, 8.507059e+37
          %v650 = vand.u32 %v561, 2147483648
          %v651 = vor.u32 1.1754944e-38, %v650
          %v652 = vsel %vm649, %v651, %v647
          %v653 = vmul.f32 1.0, %v652
          %v654 = vrcp.pop %v562
          %v655 = vmul.f32 %v562, %v654
          %v656 = vsub.f32 1.0, %v655
          %v657 = vmul.f32 %v654, %v656
          %v658 = vadd.f32 %v654, %v657
          %vm659 = vweird.f32 %v562
          %vm660 = vweird.f32 %v654
          %vm661 = vmor %vm659, %vm660
          %v662 = vsel %vm661, %v654, %v658
          %v663 = vand.u32 2147483647, %v562
          %vm664 = vcmp.eq.f32.partialorder %v663, 8.507059e+37
          %v665 = vand.u32 %v562, 2147483648
          %v666 = vor.u32 1.1754944e-38, %v665
          %v667 = vsel %vm664, %v666, %v662
          %v668 = vmul.f32 1.0, %v667
          %v669 = vrcp.pop %v563
          %v670 = vmul.f32 %v563, %v669
          %v671 = vsub.f32 1.0, %v670
          %v672 = vmul.f32 %v669, %v671
          %v673 = vadd.f32 %v669, %v672
          %vm674 = vweird.f32 %v563
          %vm675 = vweird.f32 %v669
          %vm676 = vmor %vm674, %vm675
          %v677 = vsel %vm676, %v669, %v673
          %v678 = vand.u32 2147483647, %v563
          %vm679 = vcmp.eq.f32.partialorder %v678, 8.507059e+37
          %v680 = vand.u32 %v563, 2147483648
          %v681 = vor.u32 1.1754944e-38, %v680
          %v682 = vsel %vm679, %v681, %v677
          %v683 = vmul.f32 1.0, %v682
          %v684 = vmul.f32 %v524, %v578
          %v685 = vmul.f32 %v525, %v593
          %v686 = vmul.f32 %v526, %v608
          %v687 = vmul.f32 %v527, %v623
          %v688 = vmul.f32 %v528, %v638
          %v689 = vmul.f32 %v529, %v653
          %v690 = vmul.f32 %v530, %v668
          %v691 = vmul.f32 %v531, %v683
          %692 = vst.msk [vmem:[#allocation2] sm:$0xff] %vm334, 0.0
          %vm693 = vcmask 254976
          %694 = vst.msk [vmem:[#allocation2 + $0x8] sm:$0x3] %vm693, 0.0
          %695 = vst.msk [vmem:[#allocation2 + $0x10] sm:$0xff] %vm334, 0.0
          %696 = vst.msk [vmem:[#allocation2 + $0x18] sm:$0x3] %vm693, 0.0
          %697 = vst.msk [vmem:[#allocation2 + $0x20] sm:$0xff] %vm334, 0.0
          %698 = vst.msk [vmem:[#allocation2 + $0x28] sm:$0x3] %vm693, 0.0
          %699 = vst.msk [vmem:[#allocation2 + $0x30] sm:$0xff] %vm334, 0.0
          %700 = vst.msk [vmem:[#allocation2 + $0x38] sm:$0x3] %vm693, 0.0
          %701 = vst.msk [vmem:[#allocation2 + $0x40] sm:$0xff] %vm334, 0.0
          %702 = vst.msk [vmem:[#allocation2 + $0x48] sm:$0x3] %vm693, 0.0
          %703 = vst.msk [vmem:[#allocation2 + $0x50] sm:$0xff] %vm334, 0.0
          %704 = vst.msk [vmem:[#allocation2 + $0x58] sm:$0x3] %vm693, 0.0
          %705 = vst.msk [vmem:[#allocation2 + $0x60] sm:$0xff] %vm334, 0.0
          %706 = vst.msk [vmem:[#allocation2 + $0x68] sm:$0x3] %vm693, 0.0
          %707 = vst.msk [vmem:[#allocation2 + $0x70] sm:$0xff] %vm334, 0.0
          %708 = vst.msk [vmem:[#allocation2 + $0x78] sm:$0x3] %vm693, 0.0
          %709 = vst.msk [vmem:[#allocation2 + $0x80] sm:$0xff] %vm334, 0.0
          %710 = vst.msk [vmem:[#allocation2 + $0x88] sm:$0x3] %vm693, 0.0
          %711 = vst.msk [vmem:[#allocation2 + $0x90] sm:$0xff] %vm334, 0.0
          %712 = vst.msk [vmem:[#allocation2 + $0x98] sm:$0x3] %vm693, 0.0
          %s713 = scalar_lea.vmem [#allocation2], 16
          %714 = vst.msk [vmem:[%s713 + $0x1] sm:$0xff] %vm334, %v684
          %715 = vst.msk [vmem:[%s713 + $0x11] sm:$0xff] %vm334, %v685
          %716 = vst.msk [vmem:[%s713 + $0x21] sm:$0xff] %vm334, %v686
          %717 = vst.msk [vmem:[%s713 + $0x31] sm:$0xff] %vm334, %v687
          %718 = vst.msk [vmem:[%s713 + $0x41] sm:$0xff] %vm334, %v688
          %719 = vst.msk [vmem:[%s713 + $0x51] sm:$0xff] %vm334, %v689
          %720 = vst.msk [vmem:[%s713 + $0x61] sm:$0xff] %vm334, %v690
          %721 = vst.msk [vmem:[%s713 + $0x71] sm:$0xff] %vm334, %v691
          %v722 = vld [vmem:[#allocation2] sm:$0xff]
          %v723 = vld [vmem:[#allocation2 + $0x8] sm:$0x3]
          %v724 = vld [vmem:[#allocation2 + $0x10] sm:$0xff]
          %v725 = vld [vmem:[#allocation2 + $0x18] sm:$0x3]
          %v726 = vld [vmem:[#allocation2 + $0x20] sm:$0xff]
          %v727 = vld [vmem:[#allocation2 + $0x28] sm:$0x3]
          %v728 = vld [vmem:[#allocation2 + $0x30] sm:$0xff]
          %v729 = vld [vmem:[#allocation2 + $0x38] sm:$0x3]
          %v730 = vld [vmem:[#allocation2 + $0x40] sm:$0xff]
          %v731 = vld [vmem:[#allocation2 + $0x48] sm:$0x3]
          %v732 = vld [vmem:[#allocation2 + $0x50] sm:$0xff]
          %v733 = vld [vmem:[#allocation2 + $0x58] sm:$0x3]
          %v734 = vld [vmem:[#allocation2 + $0x60] sm:$0xff]
          %v735 = vld [vmem:[#allocation2 + $0x68] sm:$0x3]
          %v736 = vld [vmem:[#allocation2 + $0x70] sm:$0xff]
          %v737 = vld [vmem:[#allocation2 + $0x78] sm:$0x3]
          %v738 = vld [vmem:[#allocation2 + $0x80] sm:$0xff]
          %v739 = vld [vmem:[#allocation2 + $0x88] sm:$0x3]
          %v740 = vld [vmem:[#allocation2 + $0x90] sm:$0xff]
          %v741 = vld [vmem:[#allocation2 + $0x98] sm:$0x3]
          %vm758 = vcmask 1046528
          %v759 = vrot.slane %v722, 1
          %v760 = vrot.slane %v723, 1
          %v761 = vsel %vm758, %v759, %v760
          %v762 = vrot.slane %v724, 1
          %v763 = vrot.slane %v725, 1
          %v764 = vsel %vm758, %v762, %v763
          %v765 = vrot.slane %v726, 1
          %v766 = vrot.slane %v727, 1
          %v767 = vsel %vm758, %v765, %v766
          %v768 = vrot.slane %v728, 1
          %v769 = vrot.slane %v729, 1
          %v770 = vsel %vm758, %v768, %v769
          %v771 = vrot.slane %v730, 1
          %v772 = vrot.slane %v731, 1
          %v773 = vsel %vm758, %v771, %v772
          %v774 = vrot.slane %v732, 1
          %v775 = vrot.slane %v733, 1
          %v776 = vsel %vm758, %v774, %v775
          %v777 = vrot.slane %v734, 1
          %v778 = vrot.slane %v735, 1
          %v779 = vsel %vm758, %v777, %v778
          %v780 = vrot.slane %v736, 1
          %v781 = vrot.slane %v737, 1
          %v782 = vsel %vm758, %v780, %v781
          %vm783 = vcmask 1045504
          %v784 = vrot.slane %v722, 2
          %v785 = vrot.slane %v723, 2
          %v786 = vsel %vm783, %v784, %v785
          %v787 = vrot.slane %v724, 2
          %v788 = vrot.slane %v725, 2
          %v789 = vsel %vm783, %v787, %v788
          %v790 = vrot.slane %v726, 2
          %v791 = vrot.slane %v727, 2
          %v792 = vsel %vm783, %v790, %v791
          %v793 = vrot.slane %v728, 2
          %v794 = vrot.slane %v729, 2
          %v795 = vsel %vm783, %v793, %v794
          %v796 = vrot.slane %v730, 2
          %v797 = vrot.slane %v731, 2
          %v798 = vsel %vm783, %v796, %v797
          %v799 = vrot.slane %v732, 2
          %v800 = vrot.slane %v733, 2
          %v801 = vsel %vm783, %v799, %v800
          %v802 = vrot.slane %v734, 2
          %v803 = vrot.slane %v735, 2
          %v804 = vsel %vm783, %v802, %v803
          %v805 = vrot.slane %v736, 2
          %v806 = vrot.slane %v737, 2
          %v807 = vsel %vm783, %v805, %v806
          %v810 = vrot.slane %v738, 1
          %v811 = vrot.slane %v739, 1
          %v812 = vsel %vm758, %v810, %v811
          %v821 = vrot.slane %v738, 2
          %v822 = vrot.slane %v739, 2
          %v823 = vsel %vm783, %v821, %v822
          %v826 = vrot.slane %v740, 1
          %v827 = vrot.slane %v741, 1
          %v828 = vsel %vm758, %v826, %v827
          %v829 = vrot.slane %v740, 2
          %v830 = vrot.slane %v741, 2
          %v831 = vsel %vm783, %v829, %v830
          %840 = vrot.lane.b32.xlu0 %v761, 32
          %v841 = vpop.permute.xlu0 %840
          %842 = vrot.lane.b32.xlu0 %v764, 32
          %v843 = vpop.permute.xlu0 %842
          %844 = vrot.lane.b32.xlu0 %v767, 32
          %v845 = vpop.permute.xlu0 %844
          %846 = vrot.lane.b32.xlu0 %v770, 32
          %v847 = vpop.permute.xlu0 %846
          %848 = vrot.lane.b32.xlu0 %v773, 32
          %v849 = vpop.permute.xlu0 %848
          %850 = vrot.lane.b32.xlu0 %v776, 32
          %v851 = vpop.permute.xlu0 %850
          %852 = vrot.lane.b32.xlu0 %v779, 32
          %v853 = vpop.permute.xlu0 %852
          %854 = vrot.lane.b32.xlu0 %v782, 32
          %v855 = vpop.permute.xlu0 %854
          %864 = vrot.lane.b32.xlu0 %v786, 64
          %v865 = vpop.permute.xlu0 %864
          %866 = vrot.lane.b32.xlu0 %v789, 64
          %v867 = vpop.permute.xlu0 %866
          %868 = vrot.lane.b32.xlu0 %v792, 64
          %v869 = vpop.permute.xlu0 %868
          %870 = vrot.lane.b32.xlu0 %v795, 64
          %v871 = vpop.permute.xlu0 %870
          %872 = vrot.lane.b32.xlu0 %v798, 64
          %v873 = vpop.permute.xlu0 %872
          %874 = vrot.lane.b32.xlu0 %v801, 64
          %v875 = vpop.permute.xlu0 %874
          %876 = vrot.lane.b32.xlu0 %v804, 64
          %v877 = vpop.permute.xlu0 %876
          %878 = vrot.lane.b32.xlu0 %v807, 64
          %v879 = vpop.permute.xlu0 %878
          %888 = vrot.lane.b32.xlu0 %v724, 96
          %v889 = vpop.permute.xlu0 %888
          %890 = vrot.lane.b32.xlu0 %v726, 96
          %v891 = vpop.permute.xlu0 %890
          %892 = vrot.lane.b32.xlu0 %v728, 96
          %v893 = vpop.permute.xlu0 %892
          %894 = vrot.lane.b32.xlu0 %v730, 96
          %v895 = vpop.permute.xlu0 %894
          %896 = vrot.lane.b32.xlu0 %v732, 96
          %v897 = vpop.permute.xlu0 %896
          %898 = vrot.lane.b32.xlu0 %v734, 96
          %v899 = vpop.permute.xlu0 %898
          %900 = vrot.lane.b32.xlu0 %v736, 96
          %v901 = vpop.permute.xlu0 %900
          %902 = vrot.lane.b32.xlu0 %v738, 96
          %v903 = vpop.permute.xlu0 %902
          %912 = vrot.lane.b32.xlu0 %v789, 32
          %v913 = vpop.permute.xlu0 %912
          %914 = vrot.lane.b32.xlu0 %v792, 32
          %v915 = vpop.permute.xlu0 %914
          %916 = vrot.lane.b32.xlu0 %v795, 32
          %v917 = vpop.permute.xlu0 %916
          %918 = vrot.lane.b32.xlu0 %v798, 32
          %v919 = vpop.permute.xlu0 %918
          %920 = vrot.lane.b32.xlu0 %v801, 32
          %v921 = vpop.permute.xlu0 %920
          %922 = vrot.lane.b32.xlu0 %v804, 32
          %v923 = vpop.permute.xlu0 %922
          %924 = vrot.lane.b32.xlu0 %v807, 32
          %v925 = vpop.permute.xlu0 %924
          %926 = vrot.lane.b32.xlu0 %v823, 32
          %v927 = vpop.permute.xlu0 %926
          %936 = vrot.lane.b32.xlu0 %v726, 64
          %v937 = vpop.permute.xlu0 %936
          %938 = vrot.lane.b32.xlu0 %v728, 64
          %v939 = vpop.permute.xlu0 %938
          %940 = vrot.lane.b32.xlu0 %v730, 64
          %v941 = vpop.permute.xlu0 %940
          %942 = vrot.lane.b32.xlu0 %v732, 64
          %v943 = vpop.permute.xlu0 %942
          %944 = vrot.lane.b32.xlu0 %v734, 64
          %v945 = vpop.permute.xlu0 %944
          %946 = vrot.lane.b32.xlu0 %v736, 64
          %v947 = vpop.permute.xlu0 %946
          %948 = vrot.lane.b32.xlu0 %v738, 64
          %v949 = vpop.permute.xlu0 %948
          %950 = vrot.lane.b32.xlu0 %v740, 64
          %v951 = vpop.permute.xlu0 %950
          %960 = vrot.lane.b32.xlu0 %v767, 96
          %v961 = vpop.permute.xlu0 %960
          %962 = vrot.lane.b32.xlu0 %v770, 96
          %v963 = vpop.permute.xlu0 %962
          %964 = vrot.lane.b32.xlu0 %v773, 96
          %v965 = vpop.permute.xlu0 %964
          %966 = vrot.lane.b32.xlu0 %v776, 96
          %v967 = vpop.permute.xlu0 %966
          %968 = vrot.lane.b32.xlu0 %v779, 96
          %v969 = vpop.permute.xlu0 %968
          %970 = vrot.lane.b32.xlu0 %v782, 96
          %v971 = vpop.permute.xlu0 %970
          %972 = vrot.lane.b32.xlu0 %v812, 96
          %v973 = vpop.permute.xlu0 %972
          %974 = vrot.lane.b32.xlu0 %v828, 96
          %v975 = vpop.permute.xlu0 %974
          %v984 = vsel %vm334, %v722, %v841
          %v985 = vsel %vm334, %v724, %v843
          %v986 = vsel %vm334, %v726, %v845
          %v987 = vsel %vm334, %v728, %v847
          %v988 = vsel %vm334, %v730, %v849
          %v989 = vsel %vm334, %v732, %v851
          %v990 = vsel %vm334, %v734, %v853
          %v991 = vsel %vm334, %v736, %v855
          %vm992 = vcmask 523264
          %v993 = vsel %vm992, %v984, %v865
          %v994 = vsel %vm992, %v985, %v867
          %v995 = vsel %vm992, %v986, %v869
          %v996 = vsel %vm992, %v987, %v871
          %v997 = vsel %vm992, %v988, %v873
          %v998 = vsel %vm992, %v989, %v875
          %v999 = vsel %vm992, %v990, %v877
          %v1000 = vsel %vm992, %v991, %v879
          %vm1001 = vcmask 785408
          %v1002 = vsel %vm1001, %v993, %v889
          %v1003 = vsel %vm1001, %v994, %v891
          %v1004 = vsel %vm1001, %v995, %v893
          %v1005 = vsel %vm1001, %v996, %v895
          %v1006 = vsel %vm1001, %v997, %v897
          %v1007 = vsel %vm1001, %v998, %v899
          %v1008 = vsel %vm1001, %v999, %v901
          %v1009 = vsel %vm1001, %v1000, %v903
          %v1010 = vsel %vm334, %v764, %v913
          %v1011 = vsel %vm334, %v767, %v915
          %v1012 = vsel %vm334, %v770, %v917
          %v1013 = vsel %vm334, %v773, %v919
          %v1014 = vsel %vm334, %v776, %v921
          %v1015 = vsel %vm334, %v779, %v923
          %v1016 = vsel %vm334, %v782, %v925
          %v1017 = vsel %vm334, %v812, %v927
          %v1018 = vsel %vm992, %v1010, %v937
          %v1019 = vsel %vm992, %v1011, %v939
          %v1020 = vsel %vm992, %v1012, %v941
          %v1021 = vsel %vm992, %v1013, %v943
          %v1022 = vsel %vm992, %v1014, %v945
          %v1023 = vsel %vm992, %v1015, %v947
          %v1024 = vsel %vm992, %v1016, %v949
          %v1025 = vsel %vm992, %v1017, %v951
          %v1026 = vsel %vm1001, %v1018, %v961
          %v1027 = vsel %vm1001, %v1019, %v963
          %v1028 = vsel %vm1001, %v1020, %v965
          %v1029 = vsel %vm1001, %v1021, %v967
          %v1030 = vsel %vm1001, %v1022, %v969
          %v1031 = vsel %vm1001, %v1023, %v971
          %v1032 = vsel %vm1001, %v1024, %v973
          %v1033 = vsel %vm1001, %v1025, %v975
          %1034 = vst [vmem:[#allocation3] sm:$0xff] %v1002
          %1035 = vst [vmem:[#allocation3 + $0x8] sm:$0xff] %v1026
          %1036 = vst.msk [vmem:[#allocation3 + $0x10] sm:$0xff] %vm334, %v792
          %1037 = vst [vmem:[#allocation3 + $0x18] sm:$0xff] %v1003
          %1038 = vst [vmem:[#allocation3 + $0x20] sm:$0xff] %v1027
          %1039 = vst.msk [vmem:[#allocation3 + $0x28] sm:$0xff] %vm334, %v795
          %1040 = vst [vmem:[#allocation3 + $0x30] sm:$0xff] %v1004
          %1041 = vst [vmem:[#allocation3 + $0x38] sm:$0xff] %v1028
          %1042 = vst.msk [vmem:[#allocation3 + $0x40] sm:$0xff] %vm334, %v798
          %1043 = vst [vmem:[#allocation3 + $0x48] sm:$0xff] %v1005
          %1044 = vst [vmem:[#allocation3 + $0x50] sm:$0xff] %v1029
          %1045 = vst.msk [vmem:[#allocation3 + $0x58] sm:$0xff] %vm334, %v801
          %1046 = vst [vmem:[#allocation3 + $0x60] sm:$0xff] %v1006
          %1047 = vst [vmem:[#allocation3 + $0x68] sm:$0xff] %v1030
          %1048 = vst.msk [vmem:[#allocation3 + $0x70] sm:$0xff] %vm334, %v804
          %1049 = vst [vmem:[#allocation3 + $0x78] sm:$0xff] %v1007
          %1050 = vst [vmem:[#allocation3 + $0x80] sm:$0xff] %v1031
          %1051 = vst.msk [vmem:[#allocation3 + $0x88] sm:$0xff] %vm334, %v807
          %1052 = vst [vmem:[#allocation3 + $0x90] sm:$0xff] %v1008
          %1053 = vst [vmem:[#allocation3 + $0x98] sm:$0xff] %v1032
          %1054 = vst.msk [vmem:[#allocation3 + $0xa0] sm:$0xff] %vm334, %v823
          %1055 = vst [vmem:[#allocation3 + $0xa8] sm:$0xff] %v1009
          %1056 = vst [vmem:[#allocation3 + $0xb0] sm:$0xff] %v1033
          %1057 = vst.msk [vmem:[#allocation3 + $0xb8] sm:$0xff] %vm334, %v831
        $region52: #{tpu_custom_call.1} parent=47 // pred_fallthru
          _
        %v1058 = vld [vmem:[#allocation3] sm:$0xff]
        %v1059 = vld [vmem:[#allocation3 + $0x8] sm:$0xff]
        %v1060 = vld [vmem:[#allocation3 + $0x10] sm:$0xff]
        %v1061 = vld [vmem:[#allocation3 + $0x18] sm:$0xff]
        %v1062 = vld [vmem:[#allocation3 + $0x20] sm:$0xff]
        %v1063 = vld [vmem:[#allocation3 + $0x28] sm:$0xff]
        %v1064 = vld [vmem:[#allocation3 + $0x30] sm:$0xff]
        %v1065 = vld [vmem:[#allocation3 + $0x38] sm:$0xff]
        %v1066 = vld [vmem:[#allocation3 + $0x40] sm:$0xff]
        %v1067 = vld [vmem:[#allocation3 + $0x48] sm:$0xff]
        %v1068 = vld [vmem:[#allocation3 + $0x50] sm:$0xff]
        %v1069 = vld [vmem:[#allocation3 + $0x58] sm:$0xff]
        %v1070 = vld [vmem:[#allocation3 + $0x60] sm:$0xff]
        %v1071 = vld [vmem:[#allocation3 + $0x68] sm:$0xff]
        %v1072 = vld [vmem:[#allocation3 + $0x70] sm:$0xff]
        %v1073 = vld [vmem:[#allocation3 + $0x78] sm:$0xff]
        %v1074 = vld [vmem:[#allocation3 + $0x80] sm:$0xff]
        %v1075 = vld [vmem:[#allocation3 + $0x88] sm:$0xff]
        %v1076 = vld [vmem:[#allocation3 + $0x90] sm:$0xff]
        %v1077 = vld [vmem:[#allocation3 + $0x98] sm:$0xff]
        %v1078 = vld [vmem:[#allocation3 + $0xa0] sm:$0xff]
        %v1079 = vld [vmem:[#allocation3 + $0xa8] sm:$0xff]
        %v1080 = vld [vmem:[#allocation3 + $0xb0] sm:$0xff]
        %v1081 = vld [vmem:[#allocation3 + $0xb8] sm:$0xff]
        %v1082 = vld [vmem:[%s318] sm:$0xff]
        %v1083 = vld [vmem:[%s318 + $0x8] sm:$0xff]
        %v1084 = vld [vmem:[%s318 + $0x10] sm:$0xff]
        %v1085 = vld [vmem:[%s318 + $0x18] sm:$0xff]
        %v1086 = vld [vmem:[%s318 + $0x20] sm:$0xff]
        %v1087 = vld [vmem:[%s318 + $0x28] sm:$0xff]
        %v1088 = vld [vmem:[%s318 + $0x30] sm:$0xff]
        %v1089 = vld [vmem:[%s318 + $0x38] sm:$0xff]
        %v1090 = vld [vmem:[%s318 + $0x40] sm:$0xff]
        %v1091 = vld [vmem:[%s318 + $0x48] sm:$0xff]
        %v1092 = vld [vmem:[%s318 + $0x50] sm:$0xff]
        %v1093 = vld [vmem:[%s318 + $0x58] sm:$0xff]
        %v1094 = vld [vmem:[%s318 + $0x60] sm:$0xff]
        %v1095 = vld [vmem:[%s318 + $0x68] sm:$0xff]
        %v1096 = vld [vmem:[%s318 + $0x70] sm:$0xff]
        %v1097 = vld [vmem:[%s318 + $0x78] sm:$0xff]
        %v1098 = vld [vmem:[%s318 + $0x80] sm:$0xff]
        %v1099 = vld [vmem:[%s318 + $0x88] sm:$0xff]
        %v1100 = vld [vmem:[%s318 + $0x90] sm:$0xff]
        %v1101 = vld [vmem:[%s318 + $0x98] sm:$0xff]
        %v1102 = vld [vmem:[%s318 + $0xa0] sm:$0xff]
        %v1103 = vld [vmem:[%s318 + $0xa8] sm:$0xff]
        %v1104 = vld [vmem:[%s318 + $0xb0] sm:$0xff]
        %v1105 = vld [vmem:[%s318 + $0xb8] sm:$0xff]
        %v1106 = vld [vmem:[%s318 + $0xc0] sm:$0xff]
        %v1107 = vld [vmem:[%s318 + $0xc8] sm:$0xff]
        %v1108 = vld [vmem:[%s318 + $0xd0] sm:$0xff]
        %v1109 = vld [vmem:[%s318 + $0xd8] sm:$0xff]
        %v1110 = vld [vmem:[%s318 + $0xe0] sm:$0xff]
        %v1111 = vld [vmem:[%s318 + $0xe8] sm:$0xff]
        %v1112 = vld [vmem:[%s318 + $0xf0] sm:$0xff]
        %v1113 = vld [vmem:[%s318 + $0xf8] sm:$0xff]
        %v1114 = vld [vmem:[%s318 + $0x100] sm:$0xff]
        %v1115 = vld [vmem:[%s318 + $0x108] sm:$0xff]
        %v1116 = vld [vmem:[%s318 + $0x110] sm:$0xff]
        %v1117 = vld [vmem:[%s318 + $0x118] sm:$0xff]
        %v1118 = vld [vmem:[%s321] sm:$0x1]
        %v1120 = vperm.slane %v1118, 0
        %vm1122 = vcmask 261120
        %v1124 = vsel %vm1122, %v1060, 0
        %v1127 = vsel %vm1122, %v1063, 0
        %v1130 = vsel %vm1122, %v1066, 0
        %v1133 = vsel %vm1122, %v1069, 0
        %v1136 = vsel %vm1122, %v1072, 0
        %v1139 = vsel %vm1122, %v1075, 0
        %v1142 = vsel %vm1122, %v1078, 0
        %v1145 = vsel %vm1122, %v1081, 0
        %1147 = vmatpush.msra.mxu0 %v1097
        %1148 = vmatpush.msra.mxu0 %v1096
        %1149 = vmatpush.msra.mxu0 %v1095
        %1150 = vmatpush.msra.mxu0 %v1094
        %1151 = vmatpush.msra.mxu0 %v1093
        %1152 = vmatpush.msra.mxu0 %v1092
        %1153 = vmatpush.msra.mxu0 %v1091
        %1154 = vmatpush.msra.mxu0 %v1090
        %1155 = vmatpush.msra.mxu0 %v1089
        %1156 = vmatpush.msra.mxu0 %v1088
        %1157 = vmatpush.msra.mxu0 %v1087
        %1158 = vmatpush.msra.mxu0 %v1086
        %1159 = vmatpush.msra.mxu0 %v1085
        %1160 = vmatpush.msra.mxu0 %v1084
        %1161 = vmatpush.msra.mxu0 %v1083
        %1162 = vmatpush.msra.mxu0 %v1082
        %1163 = vmatmul.f32.gmra.mxu0 %v1058
        %v1164 = vpop.f32.mrf.mxu0
        %v1165 = vadd.f32 %v1120, %v1164
        %1166 = vmatmul.f32.gmra.mxu0 %v1061
        %v1167 = vpop.f32.mrf.mxu0
        %v1168 = vadd.f32 %v1120, %v1167
        %1169 = vmatmul.f32.gmra.mxu0 %v1064
        %v1170 = vpop.f32.mrf.mxu0
        %v1171 = vadd.f32 %v1120, %v1170
        %1172 = vmatmul.f32.gmra.mxu0 %v1067
        %v1173 = vpop.f32.mrf.mxu0
        %v1174 = vadd.f32 %v1120, %v1173
        %1175 = vmatmul.f32.gmra.mxu0 %v1070
        %v1176 = vpop.f32.mrf.mxu0
        %v1177 = vadd.f32 %v1120, %v1176
        %1178 = vmatmul.f32.gmra.mxu0 %v1073
        %v1179 = vpop.f32.mrf.mxu0
        %v1180 = vadd.f32 %v1120, %v1179
        %1181 = vmatmul.f32.gmra.mxu0 %v1076
        %v1182 = vpop.f32.mrf.mxu0
        %v1183 = vadd.f32 %v1120, %v1182
        %1184 = vmatmul.f32.gmra.mxu0 %v1079
        %v1185 = vpop.f32.mrf.mxu0
        %v1186 = vadd.f32 %v1120, %v1185
        %1187 = vdwg.mxu0
        %1188 = vmatpush.msra.mxu0 %v1113
        %1189 = vmatpush.msra.mxu0 %v1112
        %1190 = vmatpush.msra.mxu0 %v1111
        %1191 = vmatpush.msra.mxu0 %v1110
        %1192 = vmatpush.msra.mxu0 %v1109
        %1193 = vmatpush.msra.mxu0 %v1108
        %1194 = vmatpush.msra.mxu0 %v1107
        %1195 = vmatpush.msra.mxu0 %v1106
        %1196 = vmatpush.msra.mxu0 %v1105
        %1197 = vmatpush.msra.mxu0 %v1104
        %1198 = vmatpush.msra.mxu0 %v1103
        %1199 = vmatpush.msra.mxu0 %v1102
        %1200 = vmatpush.msra.mxu0 %v1101
        %1201 = vmatpush.msra.mxu0 %v1100
        %1202 = vmatpush.msra.mxu0 %v1099
        %1203 = vmatpush.msra.mxu0 %v1098
        %1204 = vmatmul.f32.gmra.mxu0 %v1059
        %v1205 = vpop.f32.mrf.mxu0
        %v1206 = vadd.f32 %v1165, %v1205
        %1207 = vmatmul.f32.gmra.mxu0 %v1062
        %v1208 = vpop.f32.mrf.mxu0
        %v1209 = vadd.f32 %v1168, %v1208
        %1210 = vmatmul.f32.gmra.mxu0 %v1065
        %v1211 = vpop.f32.mrf.mxu0
        %v1212 = vadd.f32 %v1171, %v1211
        %1213 = vmatmul.f32.gmra.mxu0 %v1068
        %v1214 = vpop.f32.mrf.mxu0
        %v1215 = vadd.f32 %v1174, %v1214
        %1216 = vmatmul.f32.gmra.mxu0 %v1071
        %v1217 = vpop.f32.mrf.mxu0
        %v1218 = vadd.f32 %v1177, %v1217
        %1219 = vmatmul.f32.gmra.mxu0 %v1074
        %v1220 = vpop.f32.mrf.mxu0
        %v1221 = vadd.f32 %v1180, %v1220
        %1222 = vmatmul.f32.gmra.mxu0 %v1077
        %v1223 = vpop.f32.mrf.mxu0
        %v1224 = vadd.f32 %v1183, %v1223
        %1225 = vmatmul.f32.gmra.mxu0 %v1080
        %v1226 = vpop.f32.mrf.mxu0
        %v1227 = vadd.f32 %v1186, %v1226
        %1228 = vdwg.mxu0
        %1229 = vmatpush.msra.mxu0 0.0
        %1230 = vmatpush.msra.mxu0 0.0
        %1231 = vmatpush.msra.mxu0 0.0
        %1232 = vmatpush.msra.mxu0 0.0
        %1233 = vmatpush.msra.mxu0 0.0
        %1234 = vmatpush.msra.mxu0 0.0
        %1235 = vmatpush.msra.mxu0 0.0
        %1236 = vmatpush.msra.mxu0 0.0
        %1237 = vmatpush.msra.mxu0 0.0
        %1238 = vmatpush.msra.mxu0 0.0
        %1239 = vmatpush.msra.mxu0 0.0
        %1240 = vmatpush.msra.mxu0 0.0
        %1241 = vmatpush.msra.mxu0 %v1117
        %1242 = vmatpush.msra.mxu0 %v1116
        %1243 = vmatpush.msra.mxu0 %v1115
        %1244 = vmatpush.msra.mxu0 %v1114
        %1245 = vmatmul.f32.gmra.mxu0 %v1124
        %v1246 = vpop.f32.mrf.mxu0
        %v1247 = vadd.f32 %v1206, %v1246
        %1248 = vmatmul.f32.gmra.mxu0 %v1127
        %v1249 = vpop.f32.mrf.mxu0
        %v1250 = vadd.f32 %v1209, %v1249
        %1251 = vmatmul.f32.gmra.mxu0 %v1130
        %v1252 = vpop.f32.mrf.mxu0
        %v1253 = vadd.f32 %v1212, %v1252
        %1254 = vmatmul.f32.gmra.mxu0 %v1133
        %v1255 = vpop.f32.mrf.mxu0
        %v1256 = vadd.f32 %v1215, %v1255
        %1257 = vmatmul.f32.gmra.mxu0 %v1136
        %v1258 = vpop.f32.mrf.mxu0
        %v1259 = vadd.f32 %v1218, %v1258
        %1260 = vmatmul.f32.gmra.mxu0 %v1139
        %v1261 = vpop.f32.mrf.mxu0
        %v1262 = vadd.f32 %v1221, %v1261
        %1263 = vmatmul.f32.gmra.mxu0 %v1142
        %v1264 = vpop.f32.mrf.mxu0
        %v1265 = vadd.f32 %v1224, %v1264
        %1266 = vmatmul.f32.gmra.mxu0 %v1145
        %v1267 = vpop.f32.mrf.mxu0
        %v1268 = vadd.f32 %v1227, %v1267
        %1269 = vdwg.mxu0
        %vm1270 = vcmask 523264
        %1271 = vst.msk [vmem:[%s309] sm:$0xff] %vm1270, %v1247
        %1272 = vst.msk [vmem:[%s309 + $0x8] sm:$0xff] %vm1270, %v1250
        %1273 = vst.msk [vmem:[%s309 + $0x10] sm:$0xff] %vm1270, %v1253
        %1274 = vst.msk [vmem:[%s309 + $0x18] sm:$0xff] %vm1270, %v1256
        %1275 = vst.msk [vmem:[%s309 + $0x20] sm:$0xff] %vm1270, %v1259
        %1276 = vst.msk [vmem:[%s309 + $0x28] sm:$0xff] %vm1270, %v1262
        %1277 = vst.msk [vmem:[%s309 + $0x30] sm:$0xff] %vm1270, %v1265
        %1278 = vst.msk [vmem:[%s309 + $0x38] sm:$0xff] %vm1270, %v1268
        %s1279 = sand.u32 %s205, 1
        %s1280 = scalar_lea.sflag [#allocation5], %s1279
        %s1281 = sand.u32 %s205, 1
        %s1282 = smul.addr %s1281, 64
        %s1283 = scalar_lea.vmem [#allocation4], %s1282
        // Predicated region
        $region53: #{tpu_custom_call.1} parent=47 // pred_check
          %p1284 = pneg %p215
        $region54: #{tpu_custom_call.1} parent=47 // pred_check_branch
          %1286 = sbr.rel (%p1284) target = $region56
        $region55: #{tpu_custom_call.1} parent=47 // pred_region
          %1288 = vsyncadd %s1280, 0
          %s1289 = smul.addr %s25, 8
          %s1290 = sadd.s32 %s26, %s1289
          %s1291 = smul.addr %s1290, 8
          %s1292 = scalar_lea.hbm %s7, %s1291
          %s1293 = sshll.u32 %s1283, 4
          %s1294 = int_to_ptr.vmem [resolvable:$true] %s1293
          %s1295 = sshll.u32 %s1292, 4
          %s1296 = int_to_ptr.hbm [resolvable:$true] %s1295
          %1301 = dma.vmem_to_hbm [thread:$0]  %s1294, 1024, %s1296, %s1280, 128, 128, 8
        $region56: #{tpu_custom_call.1} parent=47 // pred_fallthru
          _
      $region48: #{tpu_custom_call.1} parent=5 // pred_fallthru
        _
      %p1302 = scmp.le.s32.totalorder 2, %s16
      // Predicated region
      $region57: #{tpu_custom_call.1} parent=5 // pred_check
        %p1303 = pneg %p1302
      $region58: #{tpu_custom_call.1} parent=5 // pred_check_branch
        %1305 = sbr.rel (%p1303) target = $region60
      $region59: #{tpu_custom_call.1} parent=5 // pred_region
        %s1306 = ssub.s32 %s16, 2
        // Predicated region
        $region61: #{tpu_custom_call.1} parent=59 // pred_check
          %p1307 = pneg %p221
        $region62: #{tpu_custom_call.1} parent=59 // pred_check_branch
          %1309 = sbr.rel (%p1307) target = $region64
        $region63: #{tpu_custom_call.1} parent=59 // pred_region
          %s1310 = sand.u32 %s206, 1
          %s1311 = scalar_lea.sflag [#allocation5], %s1310
          %s1312 = sand.u32 %s206, 1
          %s1313 = smul.addr %s1312, 64
          %s1314 = scalar_lea.vmem [#allocation4], %s1313
          %1316 = dma.done %s1311, 1024
        $region64: #{tpu_custom_call.1} parent=59 // pred_fallthru
          _
      $region60: #{tpu_custom_call.1} parent=5 // pred_fallthru
        _
    $region6: #{tpu_custom_call.1} parent=1 // loop_footer
      %s20 = sadd.s32 1, %s16
    $region7: #{tpu_custom_call.1} parent=1 // loop_footer_branch
      %15 = sbr.rel target = $region3
    $region8: #{tpu_custom_call.1} parent=1 // loop_exit
      _
    %1317 = vsyncpa [#allocation5], 1
    %s1318 = scalar_lea.sflag [#allocation5], 1
    %1319 = vsyncpa %s1318, 1

</llo_original>
